<compile_context>
chip_gen: v7x
topology: tpu7x:2x2x1
jax: 0.10.0
libtpu: 0.0.40
codegen_flags: <defaults>
</compile_context>

<pallas_src>
import jax
import jax.numpy as jnp
from jax import lax
from jax.experimental import pallas as pl
from jax.experimental.pallas import tpu as pltpu


def _largest_divisor_leq(n, cap):
    for c in range(min(cap, n), 0, -1):
        if n % c == 0:
            return c
    return 1


def _gru_chunk_kernel(gi_ref, whh_ref, bhn_ref, out_ref, hT_ref, h_scr):
    """One grid step = one chunk of Tc timesteps of the GRU recurrence.

    gi_ref : (Tc, B, 3H) f32  precomputed input projection, gate order (r,z,n),
                              with b_ih (all gates) and b_hh_r / b_hh_z folded in
    whh_ref: (H, 3H)     bf16 fused, pre-transposed hidden->hidden weights (resident)
    bhn_ref: (1, H)      f32  b_hh_n (must stay inside r * (h@W_hn + b_hn))
    out_ref: (Tc, B, H)  f32  GRU outputs for this chunk
    hT_ref : (1, B, H)   f32  final hidden state (resident block, written once)
    h_scr  : (B, H)      f32  hidden state carried across chunks (VMEM scratch)
    """
    c = pl.program_id(0)
    B, H = h_scr.shape
    Tc = gi_ref.shape[0]

    # Cap the unroll at 8 steps; wrap a non-unrolled loop around it if Tc grows.
    UNROLL = _largest_divisor_leq(Tc, 8)
    n_outer = Tc // UNROLL

    @pl.when(c == 0)
    def _():
        # hidden=None in the PyTorch forward -> zero initial state
        h_scr[...] = jnp.zeros_like(h_scr)

    w = whh_ref[...]                                   # (H, 3H) bf16, resident
    w_rz = w[:, : 2 * H]                               # lane-aligned slices (free)
    w_n = w[:, 2 * H:]
    b_hn = jnp.broadcast_to(bhn_ref[...], (B, H))      # hoisted out of the loop

    def gru_step(t, h_f32, h_bf16):
        gi = gi_ref[t]                                 # (B, 3H) f32
        # r/z columns first so the EUP sigmoids overlap the n-gate dot drain.
        gh_rz = jnp.dot(h_bf16, w_rz, preferred_element_type=jnp.float32)
        gh_n = jnp.dot(h_bf16, w_n, preferred_element_type=jnp.float32)
        r = jax.nn.sigmoid(gi[:, :H] + gh_rz[:, :H])
        z = jax.nn.sigmoid(gi[:, H:2 * H] + gh_rz[:, H:])
        n = jnp.tanh(gi[:, 2 * H:] + r * (gh_n + b_hn))
        h_new = (1.0 - z) * n + z * h_f32
        out_ref[t] = h_new
        # Produce the bf16 carry at the tail (overlaps with the store) so the
        # next step's matmul doesn't wait on the pack.
        return h_new, h_new.astype(jnp.bfloat16)

    h0 = h_scr[...]
    carry0 = (h0, h0.astype(jnp.bfloat16))

    def outer_body(i, carry):
        h_f32, h_bf16 = carry
        base = pl.multiple_of(i * UNROLL, UNROLL)
        for j in range(UNROLL):                        # fully unrolled inner block
            h_f32, h_bf16 = gru_step(base + j, h_f32, h_bf16)
        return (h_f32, h_bf16)

    if n_outer == 1:
        h_final, _ = outer_body(0, carry0)
    else:
        h_final, _ = lax.fori_loop(0, n_outer, outer_body, carry0)

    h_scr[...] = h_final

    @pl.when(c == pl.num_programs(0) - 1)
    def _():
        hT_ref[0] = h_final


def prepare_encoder_params(emb_table, w_ih, w_hh, b_ih, b_hh,
                           *, precompute_gi_max_vocab=8192):
    """One-time repack of PyTorch-layout Encoder params (call at load time).

    emb_table: (V, H); w_ih, w_hh: (3H, H) rows stacked (r, z, n); b_*: (3H,).
    """
    V, H = emb_table.shape
    emb_table = emb_table.astype(jnp.float32)
    wih_cat = w_ih.T.astype(jnp.float32)               # (H, 3H) columns (r|z|n)
    whh_cat = w_hh.T.astype(jnp.bfloat16)               # (H, 3H) bf16 for the MXU
    # b_hh_r / b_hh_z fold into the time-parallel input projection;
    # b_hh_n cannot (torch applies it inside r * (h @ W_hn + b_hn)).
    b_in = jnp.concatenate([
        b_ih[:H] + b_hh[:H],
        b_ih[H:2 * H] + b_hh[H:2 * H],
        b_ih[2 * H:],
    ]).astype(jnp.float32)                               # (3H,)
    b_hn = b_hh[2 * H:].reshape(1, H).astype(jnp.float32)

    gi_table = None
    if V <= precompute_gi_max_vocab:
        # Per-token-id input projection: the embedding is a pure lookup, so
        # gi(x) only depends on the token id.  Done once, HIGHEST precision.
        gi_table = (jnp.dot(emb_table, wih_cat,
                            precision=lax.Precision.HIGHEST,
                            preferred_element_type=jnp.float32)
                    + b_in)                              # (V, 3H)

    return {
        "emb_table": emb_table,
        "wih_cat": wih_cat,
        "whh_cat": whh_cat,
        "b_in": b_in,
        "b_hn": b_hn,
        "gi_table": gi_table,
    }


def encoder_forward(input_seq, params, *, chunk=32):
    """Reproduces Encoder.forward(input_seq, hidden=None).

    input_seq: (T, B) int32.  Returns (outputs (T, B, H), hidden (1, B, H)).
    """
    T, B = input_seq.shape
    H = params["emb_table"].shape[1]

    # ---- time-parallel work, off the serial critical path (XLA glue) --------
    if params["gi_table"] is not None:
        # Small vocab: single 3H-wide row gather, no XLA matmul launch.
        gi = jnp.take(params["gi_table"], input_seq, axis=0)          # (T, B, 3H)
    else:
        embedded = jnp.take(params["emb_table"], input_seq, axis=0)   # (T, B, H)
        gi = (jnp.dot(embedded.reshape(T * B, H), params["wih_cat"],
                      preferred_element_type=jnp.float32)
              + params["b_in"]).reshape(T, B, 3 * H)

    # Largest chunk size <= `chunk` that divides T.
    Tc = _largest_divisor_leq(T, chunk)

    # NOTE: kept single-core on purpose — at B=8 per-step latency is MXU
    # fill/drain + EUP and does not shrink by splitting batch across TCs.
    outputs, hidden = pl.pallas_call(
        _gru_chunk_kernel,
        out_shape=(
            jax.ShapeDtypeStruct((T, B, H), jnp.float32),
            jax.ShapeDtypeStruct((1, B, H), jnp.float32),
        ),
        grid_spec=pltpu.PrefetchScalarGridSpec(
            num_scalar_prefetch=0,
            grid=(T // Tc,),
            in_specs=[
                pl.BlockSpec((Tc, B, 3 * H), lambda c: (c, 0, 0)),  # gi chunk
                pl.BlockSpec((H, 3 * H), lambda c: (0, 0)),         # W_hh (resident)
                pl.BlockSpec((1, H), lambda c: (0, 0)),             # b_hh_n
            ],
            out_specs=[
                pl.BlockSpec((Tc, B, H), lambda c: (c, 0, 0)),      # outputs chunk
                pl.BlockSpec((1, B, H), lambda c: (0, 0, 0)),       # final hidden
            ],
            scratch_shapes=[pltpu.VMEM((B, H), jnp.float32)],
        ),
        compiler_params=pltpu.CompilerParams(
            dimension_semantics=("arbitrary",),   # sequential recurrence over time
        ),
    )(gi, params["whh_cat"], params["b_hn"])

    return outputs, hidden


def encoder_reference(input_seq, emb_table, w_ih, w_hh, b_ih, b_hh):
    """Pure-JAX f32 reference (mirrors torch.nn.GRU math) for validation."""
    H = emb_table.shape[1]
    B = input_seq.shape[1]
    embedded = jnp.take(emb_table, input_seq, axis=0)  # (T, B, H)

    def step(h, x):
        gi = jnp.dot(x, w_ih.T, precision=lax.Precision.HIGHEST) + b_ih
        gh = jnp.dot(h, w_hh.T, precision=lax.Precision.HIGHEST) + b_hh
        i_r, i_z, i_n = gi[:, :H], gi[:, H:2 * H], gi[:, 2 * H:]
        h_r, h_z, h_n = gh[:, :H], gh[:, H:2 * H], gh[:, 2 * H:]
        r = jax.nn.sigmoid(i_r + h_r)
        z = jax.nn.sigmoid(i_z + h_z)
        n = jnp.tanh(i_n + r * h_n)
        h_new = (1.0 - z) * n + z * h
        return h_new, h_new

    h0 = jnp.zeros((B, H), jnp.float32)
    hT, outs = lax.scan(step, h0, embedded)
    return outs, hT[None]


if __name__ == "__main__":
    # Small config consistent with the module (hidden_size=256 from the spec).
    T, B, H, V = 16, 8, 256, 32   # seq_len, batch, hidden_size, vocab_size

    key = jax.random.PRNGKey(0)
    k_emb, k_wih, k_whh, k_bih, k_bhh, k_ids = jax.random.split(key, 6)

    bound = 1.0 / jnp.sqrt(jnp.float32(H))
    emb_table = jax.random.normal(k_emb, (V, H), jnp.float32)
    w_ih = jax.random.uniform(k_wih, (3 * H, H), jnp.float32, -bound, bound)
    w_hh = jax.random.uniform(k_whh, (3 * H, H), jnp.float32, -bound, bound)
    b_ih = jax.random.uniform(k_bih, (3 * H,), jnp.float32, -bound, bound)
    b_hh = jax.random.uniform(k_bhh, (3 * H,), jnp.float32, -bound, bound)

    input_seq = jax.random.randint(k_ids, (T, B), 0, V, jnp.int32)

    # One-time param repack + per-token gi_table, outside the jitted forward.
    params = prepare_encoder_params(emb_table, w_ih, w_hh, b_ih, b_hh)

    fwd = jax.jit(encoder_forward, static_argnames=("chunk",))
    outputs, hidden = fwd(input_seq, params)
    jax.block_until_ready((outputs, hidden))

    ref_out, ref_hid = encoder_reference(input_seq, emb_table, w_ih, w_hh, b_ih, b_hh)
    assert outputs.shape == (T, B, H) and hidden.shape == (1, B, H)
    # bf16 recurrent weights/carry => slightly looser tolerance vs f32 reference.
    assert jnp.allclose(outputs, ref_out, atol=2e-2, rtol=2e-2)
    assert jnp.allclose(hidden, ref_hid, atol=2e-2, rtol=2e-2)

    print("KERNEL_OK")
</pallas_src>

<mosaic_0001>
module attributes {stable_mosaic.version = 11 : i64} {
  func.func @_gru_chunk_kernel(%arg0: i32, %arg1: memref<16x8x768xf32, #tpu.memory_space<vmem>>, %arg2: memref<256x768xbf16, #tpu.memory_space<vmem>>, %arg3: memref<1x256xf32, #tpu.memory_space<vmem>>, %arg4: memref<16x8x256xf32, #tpu.memory_space<vmem>>, %arg5: memref<1x8x256xf32, #tpu.memory_space<vmem>>, %arg6: memref<8x256xf32, #tpu.memory_space<vmem>>) attributes {dimension_semantics = [#tpu.dimension_semantics<arbitrary>], iteration_bounds = array<i64: 1>, scalar_prefetch = 0 : i64, scratch_operands = 1 : i64, tpu.core_type = #tpu.core_type<tc>, window_params = [{transform_indices = @transform_0, window_bounds = array<i64: 16, 8, 768>}, {pipeline_mode = #tpu.pipeline_mode<synchronous>, transform_indices = @transform_1, window_bounds = array<i64: 256, 768>}, {pipeline_mode = #tpu.pipeline_mode<synchronous>, transform_indices = @transform_2, window_bounds = array<i64: 1, 256>}, {transform_indices = @transform_3, window_bounds = array<i64: 16, 8, 256>}, {pipeline_mode = #tpu.pipeline_mode<synchronous>, transform_indices = @transform_4, window_bounds = array<i64: 1, 8, 256>}]} {
    %c0_i32 = arith.constant 0 : i32
    %0 = arith.cmpi eq, %arg0, %c0_i32 : i32
    %1 = arith.extui %0 : i1 to i32
    %c0_i32_0 = arith.constant 0 : i32
    %2 = arith.cmpi ne, %1, %c0_i32_0 : i32
    scf.if %2 {
      %cst = arith.constant 0.000000e+00 : f32
      %17 = vector.broadcast %cst : f32 to vector<8x256xf32>
      %c0_12 = arith.constant 0 : index
      %c0_13 = arith.constant 0 : index
      %18 = vector.load %arg6[%c0_12, %c0_13] : memref<8x256xf32, #tpu.memory_space<vmem>>, vector<8x256xf32>
      tpu.vector_store %arg6[%c0_12, %c0_13], %17 {strides = array<i32>} : memref<8x256xf32, #tpu.memory_space<vmem>>, vector<8x256xf32>,
    } else {
    }
    %c0 = arith.constant 0 : index
    %c0_1 = arith.constant 0 : index
    %3 = vector.load %arg2[%c0, %c0_1] : memref<256x768xbf16, #tpu.memory_space<vmem>>, vector<256x768xbf16>
    %4 = vector.extract_strided_slice %3 {offsets = [0, 0], sizes = [256, 512], strides = [1, 1]} : vector<256x768xbf16> to vector<256x512xbf16>
    %5 = vector.extract_strided_slice %3 {offsets = [0, 512], sizes = [256, 256], strides = [1, 1]} : vector<256x768xbf16> to vector<256x256xbf16>
    %c0_2 = arith.constant 0 : index
    %c0_3 = arith.constant 0 : index
    %6 = vector.load %arg3[%c0_2, %c0_3] : memref<1x256xf32, #tpu.memory_space<vmem>>, vector<1x256xf32>
    %7 = vector.shape_cast %6 : vector<1x256xf32> to vector<1x256xf32>
    %8 = vector.broadcast %7 : vector<1x256xf32> to vector<8x256xf32>
    %c0_4 = arith.constant 0 : index
    %c0_5 = arith.constant 0 : index
    %9 = vector.load %arg6[%c0_4, %c0_5] : memref<8x256xf32, #tpu.memory_space<vmem>>, vector<8x256xf32>
    %10 = arith.truncf %9 : vector<8x256xf32> to vector<8x256xbf16>
    %c0_i32_6 = arith.constant 0 : i32
    %c2_i32 = arith.constant 2 : i32
    %11 = arith.addi %c0_i32_6, %c2_i32 : i32
    %c1_i32 = arith.constant 1 : i32
    %12:2 = scf.for %arg7 = %c0_i32_6 to %11 step %c1_i32 iter_args(%arg8 = %9, %arg9 = %10) -> (vector<8x256xf32>, vector<8x256xbf16>)  : i32 {
      %c8_i32 = arith.constant 8 : i32
      %17 = arith.muli %arg7, %c8_i32 : i32
      %18 = tpu.assume_multiple %17, 8 : i32
      %c0_i32_12 = arith.constant 0 : i32
      %19 = arith.addi %18, %c0_i32_12 : i32
      %20 = arith.index_cast %19 : i32 to index
      %c0_13 = arith.constant 0 : index
      %c0_14 = arith.constant 0 : index
      %21 = vector.load %arg1[%20, %c0_13, %c0_14] : memref<16x8x768xf32, #tpu.memory_space<vmem>>, vector<1x8x768xf32>
      %22 = vector.shape_cast %21 : vector<1x8x768xf32> to vector<8x768xf32>
      %cst = arith.constant dense<0.000000e+00> : vector<8x512xf32>
      %23 = tpu.matmul %arg9, %4, %cst {dimension_numbers = #tpu.dot_dimension_numbers<[1], [0], [0], [1], [0, 0, 1, 1], [], []>} : vector<8x256xbf16>, vector<256x512xbf16>, vector<8x512xf32> -> vector<8x512xf32>
      %cst_15 = arith.constant dense<0.000000e+00> : vector<8x256xf32>
      %24 = tpu.matmul %arg9, %5, %cst_15 {dimension_numbers = #tpu.dot_dimension_numbers<[1], [0], [0], [1], [0, 0, 1, 1], [], []>} : vector<8x256xbf16>, vector<256x256xbf16>, vector<8x256xf32> -> vector<8x256xf32>
      %25 = vector.extract_strided_slice %22 {offsets = [0, 0], sizes = [8, 256], strides = [1, 1]} : vector<8x768xf32> to vector<8x256xf32>
      %26 = vector.extract_strided_slice %23 {offsets = [0, 0], sizes = [8, 256], strides = [1, 1]} : vector<8x512xf32> to vector<8x256xf32>
      %27 = arith.addf %25, %26 : vector<8x256xf32>
      %28 = arith.negf %27 : vector<8x256xf32>
      %29 = math.exp %28 : vector<8x256xf32>
      %cst_16 = arith.constant 1.000000e+00 : f32
      %30 = vector.broadcast %cst_16 : f32 to vector<8x256xf32>
      %31 = arith.addf %30, %29 : vector<8x256xf32>
      %32 = arith.divf %30, %31 : vector<8x256xf32>
      %33 = vector.extract_strided_slice %22 {offsets = [0, 256], sizes = [8, 256], strides = [1, 1]} : vector<8x768xf32> to vector<8x256xf32>
      %34 = vector.extract_strided_slice %23 {offsets = [0, 256], sizes = [8, 256], strides = [1, 1]} : vector<8x512xf32> to vector<8x256xf32>
      %35 = arith.addf %33, %34 : vector<8x256xf32>
      %36 = arith.negf %35 : vector<8x256xf32>
      %37 = math.exp %36 : vector<8x256xf32>
      %cst_17 = arith.constant 1.000000e+00 : f32
      %38 = vector.broadcast %cst_17 : f32 to vector<8x256xf32>
      %39 = arith.addf %38, %37 : vector<8x256xf32>
      %40 = arith.divf %38, %39 : vector<8x256xf32>
      %41 = vector.extract_strided_slice %22 {offsets = [0, 512], sizes = [8, 256], strides = [1, 1]} : vector<8x768xf32> to vector<8x256xf32>
      %42 = arith.addf %24, %8 : vector<8x256xf32>
      %43 = arith.mulf %32, %42 : vector<8x256xf32>
      %44 = arith.addf %41, %43 : vector<8x256xf32>
      %45 = math.tanh %44 : vector<8x256xf32>
      %cst_18 = arith.constant 1.000000e+00 : f32
      %46 = vector.broadcast %cst_18 : f32 to vector<8x256xf32>
      %47 = arith.subf %46, %40 : vector<8x256xf32>
      %48 = arith.mulf %47, %45 : vector<8x256xf32>
      %49 = arith.mulf %40, %arg8 : vector<8x256xf32>
      %50 = arith.addf %48, %49 : vector<8x256xf32>
      %51 = arith.index_cast %19 : i32 to index
      %c0_19 = arith.constant 0 : index
      %c0_20 = arith.constant 0 : index
      %52 = vector.load %arg4[%51, %c0_19, %c0_20] : memref<16x8x256xf32, #tpu.memory_space<vmem>>, vector<1x8x256xf32>
      %53 = vector.shape_cast %52 : vector<1x8x256xf32> to vector<8x256xf32>
      %54 = vector.shape_cast %50 : vector<8x256xf32> to vector<1x8x256xf32>
      tpu.vector_store %arg4[%51, %c0_19, %c0_20], %54 {strides = array<i32>} : memref<16x8x256xf32, #tpu.memory_space<vmem>>, vector<1x8x256xf32>,
      %55 = arith.truncf %50 : vector<8x256xf32> to vector<8x256xbf16>
      %c1_i32_21 = arith.constant 1 : i32
      %56 = arith.addi %18, %c1_i32_21 : i32
      %57 = arith.index_cast %56 : i32 to index
      %c0_22 = arith.constant 0 : index
      %c0_23 = arith.constant 0 : index
      %58 = vector.load %arg1[%57, %c0_22, %c0_23] : memref<16x8x768xf32, #tpu.memory_space<vmem>>, vector<1x8x768xf32>
      %59 = vector.shape_cast %58 : vector<1x8x768xf32> to vector<8x768xf32>
      %cst_24 = arith.constant dense<0.000000e+00> : vector<8x512xf32>
      %60 = tpu.matmul %55, %4, %cst_24 {dimension_numbers = #tpu.dot_dimension_numbers<[1], [0], [0], [1], [0, 0, 1, 1], [], []>} : vector<8x256xbf16>, vector<256x512xbf16>, vector<8x512xf32> -> vector<8x512xf32>
      %cst_25 = arith.constant dense<0.000000e+00> : vector<8x256xf32>
      %61 = tpu.matmul %55, %5, %cst_25 {dimension_numbers = #tpu.dot_dimension_numbers<[1], [0], [0], [1], [0, 0, 1, 1], [], []>} : vector<8x256xbf16>, vector<256x256xbf16>, vector<8x256xf32> -> vector<8x256xf32>
      %62 = vector.extract_strided_slice %59 {offsets = [0, 0], sizes = [8, 256], strides = [1, 1]} : vector<8x768xf32> to vector<8x256xf32>
      %63 = vector.extract_strided_slice %60 {offsets = [0, 0], sizes = [8, 256], strides = [1, 1]} : vector<8x512xf32> to vector<8x256xf32>
      %64 = arith.addf %62, %63 : vector<8x256xf32>
      %65 = arith.negf %64 : vector<8x256xf32>
      %66 = math.exp %65 : vector<8x256xf32>
      %cst_26 = arith.constant 1.000000e+00 : f32
      %67 = vector.broadcast %cst_26 : f32 to vector<8x256xf32>
      %68 = arith.addf %67, %66 : vector<8x256xf32>
      %69 = arith.divf %67, %68 : vector<8x256xf32>
      %70 = vector.extract_strided_slice %59 {offsets = [0, 256], sizes = [8, 256], strides = [1, 1]} : vector<8x768xf32> to vector<8x256xf32>
      %71 = vector.extract_strided_slice %60 {offsets = [0, 256], sizes = [8, 256], strides = [1, 1]} : vector<8x512xf32> to vector<8x256xf32>
      %72 = arith.addf %70, %71 : vector<8x256xf32>
      %73 = arith.negf %72 : vector<8x256xf32>
      %74 = math.exp %73 : vector<8x256xf32>
      %cst_27 = arith.constant 1.000000e+00 : f32
      %75 = vector.broadcast %cst_27 : f32 to vector<8x256xf32>
      %76 = arith.addf %75, %74 : vector<8x256xf32>
      %77 = arith.divf %75, %76 : vector<8x256xf32>
      %78 = vector.extract_strided_slice %59 {offsets = [0, 512], sizes = [8, 256], strides = [1, 1]} : vector<8x768xf32> to vector<8x256xf32>
      %79 = arith.addf %61, %8 : vector<8x256xf32>
      %80 = arith.mulf %69, %79 : vector<8x256xf32>
      %81 = arith.addf %78, %80 : vector<8x256xf32>
      %82 = math.tanh %81 : vector<8x256xf32>
      %cst_28 = arith.constant 1.000000e+00 : f32
      %83 = vector.broadcast %cst_28 : f32 to vector<8x256xf32>
      %84 = arith.subf %83, %77 : vector<8x256xf32>
      %85 = arith.mulf %84, %82 : vector<8x256xf32>
      %86 = arith.mulf %77, %50 : vector<8x256xf32>
      %87 = arith.addf %85, %86 : vector<8x256xf32>
      %88 = arith.index_cast %56 : i32 to index
      %c0_29 = arith.constant 0 : index
      %c0_30 = arith.constant 0 : index
      %89 = vector.load %arg4[%88, %c0_29, %c0_30] : memref<16x8x256xf32, #tpu.memory_space<vmem>>, vector<1x8x256xf32>
      %90 = vector.shape_cast %89 : vector<1x8x256xf32> to vector<8x256xf32>
      %91 = vector.shape_cast %87 : vector<8x256xf32> to vector<1x8x256xf32>
      tpu.vector_store %arg4[%88, %c0_29, %c0_30], %91 {strides = array<i32>} : memref<16x8x256xf32, #tpu.memory_space<vmem>>, vector<1x8x256xf32>,
      %92 = arith.truncf %87 : vector<8x256xf32> to vector<8x256xbf16>
      %c2_i32_31 = arith.constant 2 : i32
      %93 = arith.addi %18, %c2_i32_31 : i32
      %94 = arith.index_cast %93 : i32 to index
      %c0_32 = arith.constant 0 : index
      %c0_33 = arith.constant 0 : index
      %95 = vector.load %arg1[%94, %c0_32, %c0_33] : memref<16x8x768xf32, #tpu.memory_space<vmem>>, vector<1x8x768xf32>
      %96 = vector.shape_cast %95 : vector<1x8x768xf32> to vector<8x768xf32>
      %cst_34 = arith.constant dense<0.000000e+00> : vector<8x512xf32>
      %97 = tpu.matmul %92, %4, %cst_34 {dimension_numbers = #tpu.dot_dimension_numbers<[1], [0], [0], [1], [0, 0, 1, 1], [], []>} : vector<8x256xbf16>, vector<256x512xbf16>, vector<8x512xf32> -> vector<8x512xf32>
      %cst_35 = arith.constant dense<0.000000e+00> : vector<8x256xf32>
      %98 = tpu.matmul %92, %5, %cst_35 {dimension_numbers = #tpu.dot_dimension_numbers<[1], [0], [0], [1], [0, 0, 1, 1], [], []>} : vector<8x256xbf16>, vector<256x256xbf16>, vector<8x256xf32> -> vector<8x256xf32>
      %99 = vector.extract_strided_slice %96 {offsets = [0, 0], sizes = [8, 256], strides = [1, 1]} : vector<8x768xf32> to vector<8x256xf32>
      %100 = vector.extract_strided_slice %97 {offsets = [0, 0], sizes = [8, 256], strides = [1, 1]} : vector<8x512xf32> to vector<8x256xf32>
      %101 = arith.addf %99, %100 : vector<8x256xf32>
      %102 = arith.negf %101 : vector<8x256xf32>
      %103 = math.exp %102 : vector<8x256xf32>
      %cst_36 = arith.constant 1.000000e+00 : f32
      %104 = vector.broadcast %cst_36 : f32 to vector<8x256xf32>
      %105 = arith.addf %104, %103 : vector<8x256xf32>
      %106 = arith.divf %104, %105 : vector<8x256xf32>
      %107 = vector.extract_strided_slice %96 {offsets = [0, 256], sizes = [8, 256], strides = [1, 1]} : vector<8x768xf32> to vector<8x256xf32>
      %108 = vector.extract_strided_slice %97 {offsets = [0, 256], sizes = [8, 256], strides = [1, 1]} : vector<8x512xf32> to vector<8x256xf32>
      %109 = arith.addf %107, %108 : vector<8x256xf32>
      %110 = arith.negf %109 : vector<8x256xf32>
      %111 = math.exp %110 : vector<8x256xf32>
      %cst_37 = arith.constant 1.000000e+00 : f32
      %112 = vector.broadcast %cst_37 : f32 to vector<8x256xf32>
      %113 = arith.addf %112, %111 : vector<8x256xf32>
      %114 = arith.divf %112, %113 : vector<8x256xf32>
      %115 = vector.extract_strided_slice %96 {offsets = [0, 512], sizes = [8, 256], strides = [1, 1]} : vector<8x768xf32> to vector<8x256xf32>
      %116 = arith.addf %98, %8 : vector<8x256xf32>
      %117 = arith.mulf %106, %116 : vector<8x256xf32>
      %118 = arith.addf %115, %117 : vector<8x256xf32>
      %119 = math.tanh %118 : vector<8x256xf32>
      %cst_38 = arith.constant 1.000000e+00 : f32
      %120 = vector.broadcast %cst_38 : f32 to vector<8x256xf32>
      %121 = arith.subf %120, %114 : vector<8x256xf32>
      %122 = arith.mulf %121, %119 : vector<8x256xf32>
      %123 = arith.mulf %114, %87 : vector<8x256xf32>
      %124 = arith.addf %122, %123 : vector<8x256xf32>
      %125 = arith.index_cast %93 : i32 to index
      %c0_39 = arith.constant 0 : index
      %c0_40 = arith.constant 0 : index
      %126 = vector.load %arg4[%125, %c0_39, %c0_40] : memref<16x8x256xf32, #tpu.memory_space<vmem>>, vector<1x8x256xf32>
      %127 = vector.shape_cast %126 : vector<1x8x256xf32> to vector<8x256xf32>
      %128 = vector.shape_cast %124 : vector<8x256xf32> to vector<1x8x256xf32>
      tpu.vector_store %arg4[%125, %c0_39, %c0_40], %128 {strides = array<i32>} : memref<16x8x256xf32, #tpu.memory_space<vmem>>, vector<1x8x256xf32>,
      %129 = arith.truncf %124 : vector<8x256xf32> to vector<8x256xbf16>
      %c3_i32 = arith.constant 3 : i32
      %130 = arith.addi %18, %c3_i32 : i32
      %131 = arith.index_cast %130 : i32 to index
      %c0_41 = arith.constant 0 : index
      %c0_42 = arith.constant 0 : index
      %132 = vector.load %arg1[%131, %c0_41, %c0_42] : memref<16x8x768xf32, #tpu.memory_space<vmem>>, vector<1x8x768xf32>
      %133 = vector.shape_cast %132 : vector<1x8x768xf32> to vector<8x768xf32>
      %cst_43 = arith.constant dense<0.000000e+00> : vector<8x512xf32>
      %134 = tpu.matmul %129, %4, %cst_43 {dimension_numbers = #tpu.dot_dimension_numbers<[1], [0], [0], [1], [0, 0, 1, 1], [], []>} : vector<8x256xbf16>, vector<256x512xbf16>, vector<8x512xf32> -> vector<8x512xf32>
      %cst_44 = arith.constant dense<0.000000e+00> : vector<8x256xf32>
      %135 = tpu.matmul %129, %5, %cst_44 {dimension_numbers = #tpu.dot_dimension_numbers<[1], [0], [0], [1], [0, 0, 1, 1], [], []>} : vector<8x256xbf16>, vector<256x256xbf16>, vector<8x256xf32> -> vector<8x256xf32>
      %136 = vector.extract_strided_slice %133 {offsets = [0, 0], sizes = [8, 256], strides = [1, 1]} : vector<8x768xf32> to vector<8x256xf32>
      %137 = vector.extract_strided_slice %134 {offsets = [0, 0], sizes = [8, 256], strides = [1, 1]} : vector<8x512xf32> to vector<8x256xf32>
      %138 = arith.addf %136, %137 : vector<8x256xf32>
      %139 = arith.negf %138 : vector<8x256xf32>
      %140 = math.exp %139 : vector<8x256xf32>
      %cst_45 = arith.constant 1.000000e+00 : f32
      %141 = vector.broadcast %cst_45 : f32 to vector<8x256xf32>
      %142 = arith.addf %141, %140 : vector<8x256xf32>
      %143 = arith.divf %141, %142 : vector<8x256xf32>
      %144 = vector.extract_strided_slice %133 {offsets = [0, 256], sizes = [8, 256], strides = [1, 1]} : vector<8x768xf32> to vector<8x256xf32>
      %145 = vector.extract_strided_slice %134 {offsets = [0, 256], sizes = [8, 256], strides = [1, 1]} : vector<8x512xf32> to vector<8x256xf32>
      %146 = arith.addf %144, %145 : vector<8x256xf32>
      %147 = arith.negf %146 : vector<8x256xf32>
      %148 = math.exp %147 : vector<8x256xf32>
      %cst_46 = arith.constant 1.000000e+00 : f32
      %149 = vector.broadcast %cst_46 : f32 to vector<8x256xf32>
      %150 = arith.addf %149, %148 : vector<8x256xf32>
      %151 = arith.divf %149, %150 : vector<8x256xf32>
      %152 = vector.extract_strided_slice %133 {offsets = [0, 512], sizes = [8, 256], strides = [1, 1]} : vector<8x768xf32> to vector<8x256xf32>
      %153 = arith.addf %135, %8 : vector<8x256xf32>
      %154 = arith.mulf %143, %153 : vector<8x256xf32>
      %155 = arith.addf %152, %154 : vector<8x256xf32>
      %156 = math.tanh %155 : vector<8x256xf32>
      %cst_47 = arith.constant 1.000000e+00 : f32
      %157 = vector.broadcast %cst_47 : f32 to vector<8x256xf32>
      %158 = arith.subf %157, %151 : vector<8x256xf32>
      %159 = arith.mulf %158, %156 : vector<8x256xf32>
      %160 = arith.mulf %151, %124 : vector<8x256xf32>
      %161 = arith.addf %159, %160 : vector<8x256xf32>
      %162 = arith.index_cast %130 : i32 to index
      %c0_48 = arith.constant 0 : index
      %c0_49 = arith.constant 0 : index
      %163 = vector.load %arg4[%162, %c0_48, %c0_49] : memref<16x8x256xf32, #tpu.memory_space<vmem>>, vector<1x8x256xf32>
      %164 = vector.shape_cast %163 : vector<1x8x256xf32> to vector<8x256xf32>
      %165 = vector.shape_cast %161 : vector<8x256xf32> to vector<1x8x256xf32>
      tpu.vector_store %arg4[%162, %c0_48, %c0_49], %165 {strides = array<i32>} : memref<16x8x256xf32, #tpu.memory_space<vmem>>, vector<1x8x256xf32>,
      %166 = arith.truncf %161 : vector<8x256xf32> to vector<8x256xbf16>
      %c4_i32 = arith.constant 4 : i32
      %167 = arith.addi %18, %c4_i32 : i32
      %168 = arith.index_cast %167 : i32 to index
      %c0_50 = arith.constant 0 : index
      %c0_51 = arith.constant 0 : index
      %169 = vector.load %arg1[%168, %c0_50, %c0_51] : memref<16x8x768xf32, #tpu.memory_space<vmem>>, vector<1x8x768xf32>
      %170 = vector.shape_cast %169 : vector<1x8x768xf32> to vector<8x768xf32>
      %cst_52 = arith.constant dense<0.000000e+00> : vector<8x512xf32>
      %171 = tpu.matmul %166, %4, %cst_52 {dimension_numbers = #tpu.dot_dimension_numbers<[1], [0], [0], [1], [0, 0, 1, 1], [], []>} : vector<8x256xbf16>, vector<256x512xbf16>, vector<8x512xf32> -> vector<8x512xf32>
      %cst_53 = arith.constant dense<0.000000e+00> : vector<8x256xf32>
      %172 = tpu.matmul %166, %5, %cst_53 {dimension_numbers = #tpu.dot_dimension_numbers<[1], [0], [0], [1], [0, 0, 1, 1], [], []>} : vector<8x256xbf16>, vector<256x256xbf16>, vector<8x256xf32> -> vector<8x256xf32>
      %173 = vector.extract_strided_slice %170 {offsets = [0, 0], sizes = [8, 256], strides = [1, 1]} : vector<8x768xf32> to vector<8x256xf32>
      %174 = vector.extract_strided_slice %171 {offsets = [0, 0], sizes = [8, 256], strides = [1, 1]} : vector<8x512xf32> to vector<8x256xf32>
      %175 = arith.addf %173, %174 : vector<8x256xf32>
      %176 = arith.negf %175 : vector<8x256xf32>
      %177 = math.exp %176 : vector<8x256xf32>
      %cst_54 = arith.constant 1.000000e+00 : f32
      %178 = vector.broadcast %cst_54 : f32 to vector<8x256xf32>
      %179 = arith.addf %178, %177 : vector<8x256xf32>
      %180 = arith.divf %178, %179 : vector<8x256xf32>
      %181 = vector.extract_strided_slice %170 {offsets = [0, 256], sizes = [8, 256], strides = [1, 1]} : vector<8x768xf32> to vector<8x256xf32>
      %182 = vector.extract_strided_slice %171 {offsets = [0, 256], sizes = [8, 256], strides = [1, 1]} : vector<8x512xf32> to vector<8x256xf32>
      %183 = arith.addf %181, %182 : vector<8x256xf32>
      %184 = arith.negf %183 : vector<8x256xf32>
      %185 = math.exp %184 : vector<8x256xf32>
      %cst_55 = arith.constant 1.000000e+00 : f32
      %186 = vector.broadcast %cst_55 : f32 to vector<8x256xf32>
      %187 = arith.addf %186, %185 : vector<8x256xf32>
      %188 = arith.divf %186, %187 : vector<8x256xf32>
      %189 = vector.extract_strided_slice %170 {offsets = [0, 512], sizes = [8, 256], strides = [1, 1]} : vector<8x768xf32> to vector<8x256xf32>
      %190 = arith.addf %172, %8 : vector<8x256xf32>
      %191 = arith.mulf %180, %190 : vector<8x256xf32>
      %192 = arith.addf %189, %191 : vector<8x256xf32>
      %193 = math.tanh %192 : vector<8x256xf32>
      %cst_56 = arith.constant 1.000000e+00 : f32
      %194 = vector.broadcast %cst_56 : f32 to vector<8x256xf32>
      %195 = arith.subf %194, %188 : vector<8x256xf32>
      %196 = arith.mulf %195, %193 : vector<8x256xf32>
      %197 = arith.mulf %188, %161 : vector<8x256xf32>
      %198 = arith.addf %196, %197 : vector<8x256xf32>
      %199 = arith.index_cast %167 : i32 to index
      %c0_57 = arith.constant 0 : index
      %c0_58 = arith.constant 0 : index
      %200 = vector.load %arg4[%199, %c0_57, %c0_58] : memref<16x8x256xf32, #tpu.memory_space<vmem>>, vector<1x8x256xf32>
      %201 = vector.shape_cast %200 : vector<1x8x256xf32> to vector<8x256xf32>
      %202 = vector.shape_cast %198 : vector<8x256xf32> to vector<1x8x256xf32>
      tpu.vector_store %arg4[%199, %c0_57, %c0_58], %202 {strides = array<i32>} : memref<16x8x256xf32, #tpu.memory_space<vmem>>, vector<1x8x256xf32>,
      %203 = arith.truncf %198 : vector<8x256xf32> to vector<8x256xbf16>
      %c5_i32 = arith.constant 5 : i32
      %204 = arith.addi %18, %c5_i32 : i32
      %205 = arith.index_cast %204 : i32 to index
      %c0_59 = arith.constant 0 : index
      %c0_60 = arith.constant 0 : index
      %206 = vector.load %arg1[%205, %c0_59, %c0_60] : memref<16x8x768xf32, #tpu.memory_space<vmem>>, vector<1x8x768xf32>
      %207 = vector.shape_cast %206 : vector<1x8x768xf32> to vector<8x768xf32>
      %cst_61 = arith.constant dense<0.000000e+00> : vector<8x512xf32>
      %208 = tpu.matmul %203, %4, %cst_61 {dimension_numbers = #tpu.dot_dimension_numbers<[1], [0], [0], [1], [0, 0, 1, 1], [], []>} : vector<8x256xbf16>, vector<256x512xbf16>, vector<8x512xf32> -> vector<8x512xf32>
      %cst_62 = arith.constant dense<0.000000e+00> : vector<8x256xf32>
      %209 = tpu.matmul %203, %5, %cst_62 {dimension_numbers = #tpu.dot_dimension_numbers<[1], [0], [0], [1], [0, 0, 1, 1], [], []>} : vector<8x256xbf16>, vector<256x256xbf16>, vector<8x256xf32> -> vector<8x256xf32>
      %210 = vector.extract_strided_slice %207 {offsets = [0, 0], sizes = [8, 256], strides = [1, 1]} : vector<8x768xf32> to vector<8x256xf32>
      %211 = vector.extract_strided_slice %208 {offsets = [0, 0], sizes = [8, 256], strides = [1, 1]} : vector<8x512xf32> to vector<8x256xf32>
      %212 = arith.addf %210, %211 : vector<8x256xf32>
      %213 = arith.negf %212 : vector<8x256xf32>
      %214 = math.exp %213 : vector<8x256xf32>
      %cst_63 = arith.constant 1.000000e+00 : f32
      %215 = vector.broadcast %cst_63 : f32 to vector<8x256xf32>
      %216 = arith.addf %215, %214 : vector<8x256xf32>
      %217 = arith.divf %215, %216 : vector<8x256xf32>
      %218 = vector.extract_strided_slice %207 {offsets = [0, 256], sizes = [8, 256], strides = [1, 1]} : vector<8x768xf32> to vector<8x256xf32>
      %219 = vector.extract_strided_slice %208 {offsets = [0, 256], sizes = [8, 256], strides = [1, 1]} : vector<8x512xf32> to vector<8x256xf32>
      %220 = arith.addf %218, %219 : vector<8x256xf32>
      %221 = arith.negf %220 : vector<8x256xf32>
      %222 = math.exp %221 : vector<8x256xf32>
      %cst_64 = arith.constant 1.000000e+00 : f32
      %223 = vector.broadcast %cst_64 : f32 to vector<8x256xf32>
      %224 = arith.addf %223, %222 : vector<8x256xf32>
      %225 = arith.divf %223, %224 : vector<8x256xf32>
      %226 = vector.extract_strided_slice %207 {offsets = [0, 512], sizes = [8, 256], strides = [1, 1]} : vector<8x768xf32> to vector<8x256xf32>
      %227 = arith.addf %209, %8 : vector<8x256xf32>
      %228 = arith.mulf %217, %227 : vector<8x256xf32>
      %229 = arith.addf %226, %228 : vector<8x256xf32>
      %230 = math.tanh %229 : vector<8x256xf32>
      %cst_65 = arith.constant 1.000000e+00 : f32
      %231 = vector.broadcast %cst_65 : f32 to vector<8x256xf32>
      %232 = arith.subf %231, %225 : vector<8x256xf32>
      %233 = arith.mulf %232, %230 : vector<8x256xf32>
      %234 = arith.mulf %225, %198 : vector<8x256xf32>
      %235 = arith.addf %233, %234 : vector<8x256xf32>
      %236 = arith.index_cast %204 : i32 to index
      %c0_66 = arith.constant 0 : index
      %c0_67 = arith.constant 0 : index
      %237 = vector.load %arg4[%236, %c0_66, %c0_67] : memref<16x8x256xf32, #tpu.memory_space<vmem>>, vector<1x8x256xf32>
      %238 = vector.shape_cast %237 : vector<1x8x256xf32> to vector<8x256xf32>
      %239 = vector.shape_cast %235 : vector<8x256xf32> to vector<1x8x256xf32>
      tpu.vector_store %arg4[%236, %c0_66, %c0_67], %239 {strides = array<i32>} : memref<16x8x256xf32, #tpu.memory_space<vmem>>, vector<1x8x256xf32>,
      %240 = arith.truncf %235 : vector<8x256xf32> to vector<8x256xbf16>
      %c6_i32 = arith.constant 6 : i32
      %241 = arith.addi %18, %c6_i32 : i32
      %242 = arith.index_cast %241 : i32 to index
      %c0_68 = arith.constant 0 : index
      %c0_69 = arith.constant 0 : index
      %243 = vector.load %arg1[%242, %c0_68, %c0_69] : memref<16x8x768xf32, #tpu.memory_space<vmem>>, vector<1x8x768xf32>
      %244 = vector.shape_cast %243 : vector<1x8x768xf32> to vector<8x768xf32>
      %cst_70 = arith.constant dense<0.000000e+00> : vector<8x512xf32>
      %245 = tpu.matmul %240, %4, %cst_70 {dimension_numbers = #tpu.dot_dimension_numbers<[1], [0], [0], [1], [0, 0, 1, 1], [], []>} : vector<8x256xbf16>, vector<256x512xbf16>, vector<8x512xf32> -> vector<8x512xf32>
      %cst_71 = arith.constant dense<0.000000e+00> : vector<8x256xf32>
      %246 = tpu.matmul %240, %5, %cst_71 {dimension_numbers = #tpu.dot_dimension_numbers<[1], [0], [0], [1], [0, 0, 1, 1], [], []>} : vector<8x256xbf16>, vector<256x256xbf16>, vector<8x256xf32> -> vector<8x256xf32>
      %247 = vector.extract_strided_slice %244 {offsets = [0, 0], sizes = [8, 256], strides = [1, 1]} : vector<8x768xf32> to vector<8x256xf32>
      %248 = vector.extract_strided_slice %245 {offsets = [0, 0], sizes = [8, 256], strides = [1, 1]} : vector<8x512xf32> to vector<8x256xf32>
      %249 = arith.addf %247, %248 : vector<8x256xf32>
      %250 = arith.negf %249 : vector<8x256xf32>
      %251 = math.exp %250 : vector<8x256xf32>
      %cst_72 = arith.constant 1.000000e+00 : f32
      %252 = vector.broadcast %cst_72 : f32 to vector<8x256xf32>
      %253 = arith.addf %252, %251 : vector<8x256xf32>
      %254 = arith.divf %252, %253 : vector<8x256xf32>
      %255 = vector.extract_strided_slice %244 {offsets = [0, 256], sizes = [8, 256], strides = [1, 1]} : vector<8x768xf32> to vector<8x256xf32>
      %256 = vector.extract_strided_slice %245 {offsets = [0, 256], sizes = [8, 256], strides = [1, 1]} : vector<8x512xf32> to vector<8x256xf32>
      %257 = arith.addf %255, %256 : vector<8x256xf32>
      %258 = arith.negf %257 : vector<8x256xf32>
      %259 = math.exp %258 : vector<8x256xf32>
      %cst_73 = arith.constant 1.000000e+00 : f32
      %260 = vector.broadcast %cst_73 : f32 to vector<8x256xf32>
      %261 = arith.addf %260, %259 : vector<8x256xf32>
      %262 = arith.divf %260, %261 : vector<8x256xf32>
      %263 = vector.extract_strided_slice %244 {offsets = [0, 512], sizes = [8, 256], strides = [1, 1]} : vector<8x768xf32> to vector<8x256xf32>
      %264 = arith.addf %246, %8 : vector<8x256xf32>
      %265 = arith.mulf %254, %264 : vector<8x256xf32>
      %266 = arith.addf %263, %265 : vector<8x256xf32>
      %267 = math.tanh %266 : vector<8x256xf32>
      %cst_74 = arith.constant 1.000000e+00 : f32
      %268 = vector.broadcast %cst_74 : f32 to vector<8x256xf32>
      %269 = arith.subf %268, %262 : vector<8x256xf32>
      %270 = arith.mulf %269, %267 : vector<8x256xf32>
      %271 = arith.mulf %262, %235 : vector<8x256xf32>
      %272 = arith.addf %270, %271 : vector<8x256xf32>
      %273 = arith.index_cast %241 : i32 to index
      %c0_75 = arith.constant 0 : index
      %c0_76 = arith.constant 0 : index
      %274 = vector.load %arg4[%273, %c0_75, %c0_76] : memref<16x8x256xf32, #tpu.memory_space<vmem>>, vector<1x8x256xf32>
      %275 = vector.shape_cast %274 : vector<1x8x256xf32> to vector<8x256xf32>
      %276 = vector.shape_cast %272 : vector<8x256xf32> to vector<1x8x256xf32>
      tpu.vector_store %arg4[%273, %c0_75, %c0_76], %276 {strides = array<i32>} : memref<16x8x256xf32, #tpu.memory_space<vmem>>, vector<1x8x256xf32>,
      %277 = arith.truncf %272 : vector<8x256xf32> to vector<8x256xbf16>
      %c7_i32 = arith.constant 7 : i32
      %278 = arith.addi %18, %c7_i32 : i32
      %279 = arith.index_cast %278 : i32 to index
      %c0_77 = arith.constant 0 : index
      %c0_78 = arith.constant 0 : index
      %280 = vector.load %arg1[%279, %c0_77, %c0_78] : memref<16x8x768xf32, #tpu.memory_space<vmem>>, vector<1x8x768xf32>
      %281 = vector.shape_cast %280 : vector<1x8x768xf32> to vector<8x768xf32>
      %cst_79 = arith.constant dense<0.000000e+00> : vector<8x512xf32>
      %282 = tpu.matmul %277, %4, %cst_79 {dimension_numbers = #tpu.dot_dimension_numbers<[1], [0], [0], [1], [0, 0, 1, 1], [], []>} : vector<8x256xbf16>, vector<256x512xbf16>, vector<8x512xf32> -> vector<8x512xf32>
      %cst_80 = arith.constant dense<0.000000e+00> : vector<8x256xf32>
      %283 = tpu.matmul %277, %5, %cst_80 {dimension_numbers = #tpu.dot_dimension_numbers<[1], [0], [0], [1], [0, 0, 1, 1], [], []>} : vector<8x256xbf16>, vector<256x256xbf16>, vector<8x256xf32> -> vector<8x256xf32>
      %284 = vector.extract_strided_slice %281 {offsets = [0, 0], sizes = [8, 256], strides = [1, 1]} : vector<8x768xf32> to vector<8x256xf32>
      %285 = vector.extract_strided_slice %282 {offsets = [0, 0], sizes = [8, 256], strides = [1, 1]} : vector<8x512xf32> to vector<8x256xf32>
      %286 = arith.addf %284, %285 : vector<8x256xf32>
      %287 = arith.negf %286 : vector<8x256xf32>
      %288 = math.exp %287 : vector<8x256xf32>
      %cst_81 = arith.constant 1.000000e+00 : f32
      %289 = vector.broadcast %cst_81 : f32 to vector<8x256xf32>
      %290 = arith.addf %289, %288 : vector<8x256xf32>
      %291 = arith.divf %289, %290 : vector<8x256xf32>
      %292 = vector.extract_strided_slice %281 {offsets = [0, 256], sizes = [8, 256], strides = [1, 1]} : vector<8x768xf32> to vector<8x256xf32>
      %293 = vector.extract_strided_slice %282 {offsets = [0, 256], sizes = [8, 256], strides = [1, 1]} : vector<8x512xf32> to vector<8x256xf32>
      %294 = arith.addf %292, %293 : vector<8x256xf32>
      %295 = arith.negf %294 : vector<8x256xf32>
      %296 = math.exp %295 : vector<8x256xf32>
      %cst_82 = arith.constant 1.000000e+00 : f32
      %297 = vector.broadcast %cst_82 : f32 to vector<8x256xf32>
      %298 = arith.addf %297, %296 : vector<8x256xf32>
      %299 = arith.divf %297, %298 : vector<8x256xf32>
      %300 = vector.extract_strided_slice %281 {offsets = [0, 512], sizes = [8, 256], strides = [1, 1]} : vector<8x768xf32> to vector<8x256xf32>
      %301 = arith.addf %283, %8 : vector<8x256xf32>
      %302 = arith.mulf %291, %301 : vector<8x256xf32>
      %303 = arith.addf %300, %302 : vector<8x256xf32>
      %304 = math.tanh %303 : vector<8x256xf32>
      %cst_83 = arith.constant 1.000000e+00 : f32
      %305 = vector.broadcast %cst_83 : f32 to vector<8x256xf32>
      %306 = arith.subf %305, %299 : vector<8x256xf32>
      %307 = arith.mulf %306, %304 : vector<8x256xf32>
      %308 = arith.mulf %299, %272 : vector<8x256xf32>
      %309 = arith.addf %307, %308 : vector<8x256xf32>
      %310 = arith.index_cast %278 : i32 to index
      %c0_84 = arith.constant 0 : index
      %c0_85 = arith.constant 0 : index
      %311 = vector.load %arg4[%310, %c0_84, %c0_85] : memref<16x8x256xf32, #tpu.memory_space<vmem>>, vector<1x8x256xf32>
      %312 = vector.shape_cast %311 : vector<1x8x256xf32> to vector<8x256xf32>
      %313 = vector.shape_cast %309 : vector<8x256xf32> to vector<1x8x256xf32>
      tpu.vector_store %arg4[%310, %c0_84, %c0_85], %313 {strides = array<i32>} : memref<16x8x256xf32, #tpu.memory_space<vmem>>, vector<1x8x256xf32>,
      %314 = arith.truncf %309 : vector<8x256xf32> to vector<8x256xbf16>
      scf.yield %309, %314 : vector<8x256xf32>, vector<8x256xbf16>
    }
    %c2_i32_7 = arith.constant 2 : i32
    %c0_8 = arith.constant 0 : index
    %c0_9 = arith.constant 0 : index
    %13 = vector.load %arg6[%c0_8, %c0_9] : memref<8x256xf32, #tpu.memory_space<vmem>>, vector<8x256xf32>
    tpu.vector_store %arg6[%c0_8, %c0_9], %12#0 {strides = array<i32>} : memref<8x256xf32, #tpu.memory_space<vmem>>, vector<8x256xf32>,
    %c0_i32_10 = arith.constant 0 : i32
    %14 = arith.cmpi eq, %arg0, %c0_i32_10 : i32
    %15 = arith.extui %14 : i1 to i32
    %c0_i32_11 = arith.constant 0 : i32
    %16 = arith.cmpi ne, %15, %c0_i32_11 : i32
    scf.if %16 {
      %c0_12 = arith.constant 0 : index
      %c0_13 = arith.constant 0 : index
      %c0_14 = arith.constant 0 : index
      %17 = vector.load %arg5[%c0_12, %c0_13, %c0_14] : memref<1x8x256xf32, #tpu.memory_space<vmem>>, vector<1x8x256xf32>
      %18 = vector.shape_cast %17 : vector<1x8x256xf32> to vector<8x256xf32>
      %19 = vector.shape_cast %12#0 : vector<8x256xf32> to vector<1x8x256xf32>
      tpu.vector_store %arg5[%c0_12, %c0_13, %c0_14], %19 {strides = array<i32>} : memref<1x8x256xf32, #tpu.memory_space<vmem>>, vector<1x8x256xf32>,
    } else {
    }
    return
  }
  func.func @transform_0(%arg0: i32) -> (i32, i32, i32) {
    %c0_i32 = arith.constant 0 : i32
    %c0_i32_0 = arith.constant 0 : i32
    %c0_i32_1 = arith.constant 0 : i32
    return %arg0, %c0_i32, %c0_i32_0 : i32, i32, i32
  }
  func.func @transform_1(%arg0: i32) -> (i32, i32) {
    %c0_i32 = arith.constant 0 : i32
    %c0_i32_0 = arith.constant 0 : i32
    %c0_i32_1 = arith.constant 0 : i32
    return %c0_i32, %c0_i32_0 : i32, i32
  }
  func.func @transform_2(%arg0: i32) -> (i32, i32) {
    %c0_i32 = arith.constant 0 : i32
    %c0_i32_0 = arith.constant 0 : i32
    %c0_i32_1 = arith.constant 0 : i32
    return %c0_i32, %c0_i32_0 : i32, i32
  }
  func.func @transform_3(%arg0: i32) -> (i32, i32, i32) {
    %c0_i32 = arith.constant 0 : i32
    %c0_i32_0 = arith.constant 0 : i32
    %c0_i32_1 = arith.constant 0 : i32
    return %arg0, %c0_i32, %c0_i32_0 : i32, i32, i32
  }
  func.func @transform_4(%arg0: i32) -> (i32, i32, i32) {
    %c0_i32 = arith.constant 0 : i32
    %c0_i32_0 = arith.constant 0 : i32
    %c0_i32_1 = arith.constant 0 : i32
    %c0_i32_2 = arith.constant 0 : i32
    return %c0_i32, %c0_i32_0, %c0_i32_1 : i32, i32, i32
  }
}

</mosaic_0001>

<llo_original>
// kernel: encoder_forward.1
$region0: #{encoder_forward.1}
  #allocation0 [shape = 'u32[]', space=smem, size = 0x4, offset = 0x4, fixed_abs, tag = 'smem constant byte address 0x4 - core index']
  #allocation1 [shape = 'u32[144,128]{1,0:T(1,128)}', space=vmem, size = 0x12000, scoped, tag = 'internal scratch']
  #allocation2 [shape = 'f32[8,256]{1,0:T(8,128)}', space=vmem, size = 0x2000, scoped, tag = 'scratch operand']
  %s0 = inlined_call_operand.vmem [shape: f32[16,8,768], index: 0, kind: input, shape index: {}]
  %s1 = inlined_call_operand.vmem [shape: bf16[256,768], index: 1, kind: input, shape index: {}]
  %s2 = inlined_call_operand.vmem [shape: f32[1,256], index: 2, kind: input, shape index: {}]
  %s3 = inlined_call_operand.hbm [shape: f32[16,8,256], index: 3, kind: output, shape index: {0}]
  %s4 = inlined_call_operand.hbm [shape: f32[1,8,256], index: 4, kind: output, shape index: {1}]
  %5 = xla_tuple %s3, %s4
  %s6 = sld [smem:[#allocation0]]
  $region45: #{encoder_forward.1} parent=0
    _
  %s8 = ssub.s32 1, %s6
  %s9 = scalar_select 0, %s8, %s6
  $region1: #{encoder_forward.1} parent=0
    #allocation3 [shape = 'u8[131072]{0}', space=vmem, size = 0x20000, scoped, tag = 'output window, operand 0, single buffered']
    #allocation4 [shape = 's32[1]{0}', space=sflag, size = 0x4, scoped, tag = 'scoped memory for encoder_forward.1']
    #allocation5 [shape = 'u8[8192]{0}', space=vmem, size = 0x2000, scoped, tag = 'output window, operand 1, single buffered']
    #allocation6 [shape = 's32[1]{0}', space=sflag, size = 0x4, scoped, tag = 'scoped memory for encoder_forward.1']
    %10 = vsyncpa [#allocation4], 0
    %11 = vsyncpa [#allocation6], 0
    // Predicated region
    $region2: #{encoder_forward.1} parent=1 // pred_check
      _
    $region3: #{encoder_forward.1} parent=1 // pred_check_branch
      %13 = sbr.rel (0) target = $region5
    $region4: #{encoder_forward.1} parent=1 // pred_region
      _
    $region5: #{encoder_forward.1} parent=1 // pred_fallthru
      _
    // Predicated region
    $region6: #{encoder_forward.1} parent=1 // pred_check
      _
    $region7: #{encoder_forward.1} parent=1 // pred_check_branch
      %15 = sbr.rel (0) target = $region9
    $region8: #{encoder_forward.1} parent=1 // pred_region
      _
    $region9: #{encoder_forward.1} parent=1 // pred_fallthru
      _
    // Predicated region
    $region10: #{encoder_forward.1} parent=1 // pred_check
      _
    $region11: #{encoder_forward.1} parent=1 // pred_check_branch
      %17 = sbr.rel (0) target = $region13
    $region12: #{encoder_forward.1} parent=1 // pred_region
      _
    $region13: #{encoder_forward.1} parent=1 // pred_fallthru
      _
    %p18 = scmp.eq.s32.totalorder 0, 0
    // Predicated region
    $region14: #{encoder_forward.1} parent=1 // pred_check
      %p19 = pneg %p18
    $region15: #{encoder_forward.1} parent=1 // pred_check_branch
      %21 = sbr.rel (%p19) target = $region17
    $region16: #{encoder_forward.1} parent=1 // pred_region
      %22 = vst [vmem:[#allocation2] sm:$0xff] 0.0
      %23 = vst [vmem:[#allocation2 + $0x8] sm:$0xff] 0.0
    $region17: #{encoder_forward.1} parent=1 // pred_fallthru
      _
    %v24 = vld [vmem:[%s1] sm:$0xff]
    %v25 = vld [vmem:[%s1 + $0x8] sm:$0xff]
    %v26 = vld [vmem:[%s1 + $0x10] sm:$0xff]
    %v27 = vld [vmem:[%s1 + $0x18] sm:$0xff]
    %v28 = vld [vmem:[%s1 + $0x20] sm:$0xff]
    %v29 = vld [vmem:[%s1 + $0x28] sm:$0xff]
    %v30 = vld [vmem:[%s1 + $0x30] sm:$0xff]
    %v31 = vld [vmem:[%s1 + $0x38] sm:$0xff]
    %v32 = vld [vmem:[%s1 + $0x40] sm:$0xff]
    %v33 = vld [vmem:[%s1 + $0x48] sm:$0xff]
    %v34 = vld [vmem:[%s1 + $0x50] sm:$0xff]
    %v35 = vld [vmem:[%s1 + $0x58] sm:$0xff]
    %v36 = vld [vmem:[%s1 + $0x60] sm:$0xff]
    %v37 = vld [vmem:[%s1 + $0x68] sm:$0xff]
    %v38 = vld [vmem:[%s1 + $0x70] sm:$0xff]
    %v39 = vld [vmem:[%s1 + $0x78] sm:$0xff]
    %v40 = vld [vmem:[%s1 + $0x80] sm:$0xff]
    %v41 = vld [vmem:[%s1 + $0x88] sm:$0xff]
    %v42 = vld [vmem:[%s1 + $0x90] sm:$0xff]
    %v43 = vld [vmem:[%s1 + $0x98] sm:$0xff]
    %v44 = vld [vmem:[%s1 + $0xa0] sm:$0xff]
    %v45 = vld [vmem:[%s1 + $0xa8] sm:$0xff]
    %v46 = vld [vmem:[%s1 + $0xb0] sm:$0xff]
    %v47 = vld [vmem:[%s1 + $0xb8] sm:$0xff]
    %v48 = vld [vmem:[%s1 + $0xc0] sm:$0xff]
    %v49 = vld [vmem:[%s1 + $0xc8] sm:$0xff]
    %v50 = vld [vmem:[%s1 + $0xd0] sm:$0xff]
    %v51 = vld [vmem:[%s1 + $0xd8] sm:$0xff]
    %v52 = vld [vmem:[%s1 + $0xe0] sm:$0xff]
    %v53 = vld [vmem:[%s1 + $0xe8] sm:$0xff]
    %v54 = vld [vmem:[%s1 + $0xf0] sm:$0xff]
    %v55 = vld [vmem:[%s1 + $0xf8] sm:$0xff]
    %v56 = vld [vmem:[%s1 + $0x100] sm:$0xff]
    %v57 = vld [vmem:[%s1 + $0x108] sm:$0xff]
    %v58 = vld [vmem:[%s1 + $0x110] sm:$0xff]
    %v59 = vld [vmem:[%s1 + $0x118] sm:$0xff]
    %v60 = vld [vmem:[%s1 + $0x120] sm:$0xff]
    %v61 = vld [vmem:[%s1 + $0x128] sm:$0xff]
    %v62 = vld [vmem:[%s1 + $0x130] sm:$0xff]
    %v63 = vld [vmem:[%s1 + $0x138] sm:$0xff]
    %v64 = vld [vmem:[%s1 + $0x140] sm:$0xff]
    %v65 = vld [vmem:[%s1 + $0x148] sm:$0xff]
    %v66 = vld [vmem:[%s1 + $0x150] sm:$0xff]
    %v67 = vld [vmem:[%s1 + $0x158] sm:$0xff]
    %v68 = vld [vmem:[%s1 + $0x160] sm:$0xff]
    %v69 = vld [vmem:[%s1 + $0x168] sm:$0xff]
    %v70 = vld [vmem:[%s1 + $0x170] sm:$0xff]
    %v71 = vld [vmem:[%s1 + $0x178] sm:$0xff]
    %v72 = vld [vmem:[%s1 + $0x180] sm:$0xff]
    %v73 = vld [vmem:[%s1 + $0x188] sm:$0xff]
    %v74 = vld [vmem:[%s1 + $0x190] sm:$0xff]
    %v75 = vld [vmem:[%s1 + $0x198] sm:$0xff]
    %v76 = vld [vmem:[%s1 + $0x1a0] sm:$0xff]
    %v77 = vld [vmem:[%s1 + $0x1a8] sm:$0xff]
    %v78 = vld [vmem:[%s1 + $0x1b0] sm:$0xff]
    %v79 = vld [vmem:[%s1 + $0x1b8] sm:$0xff]
    %v80 = vld [vmem:[%s1 + $0x1c0] sm:$0xff]
    %v81 = vld [vmem:[%s1 + $0x1c8] sm:$0xff]
    %v82 = vld [vmem:[%s1 + $0x1d0] sm:$0xff]
    %v83 = vld [vmem:[%s1 + $0x1d8] sm:$0xff]
    %v84 = vld [vmem:[%s1 + $0x1e0] sm:$0xff]
    %v85 = vld [vmem:[%s1 + $0x1e8] sm:$0xff]
    %v86 = vld [vmem:[%s1 + $0x1f0] sm:$0xff]
    %v87 = vld [vmem:[%s1 + $0x1f8] sm:$0xff]
    %v88 = vld [vmem:[%s1 + $0x200] sm:$0xff]
    %v89 = vld [vmem:[%s1 + $0x208] sm:$0xff]
    %v90 = vld [vmem:[%s1 + $0x210] sm:$0xff]
    %v91 = vld [vmem:[%s1 + $0x218] sm:$0xff]
    %v92 = vld [vmem:[%s1 + $0x220] sm:$0xff]
    %v93 = vld [vmem:[%s1 + $0x228] sm:$0xff]
    %v94 = vld [vmem:[%s1 + $0x230] sm:$0xff]
    %v95 = vld [vmem:[%s1 + $0x238] sm:$0xff]
    %v96 = vld [vmem:[%s1 + $0x240] sm:$0xff]
    %v97 = vld [vmem:[%s1 + $0x248] sm:$0xff]
    %v98 = vld [vmem:[%s1 + $0x250] sm:$0xff]
    %v99 = vld [vmem:[%s1 + $0x258] sm:$0xff]
    %v100 = vld [vmem:[%s1 + $0x260] sm:$0xff]
    %v101 = vld [vmem:[%s1 + $0x268] sm:$0xff]
    %v102 = vld [vmem:[%s1 + $0x270] sm:$0xff]
    %v103 = vld [vmem:[%s1 + $0x278] sm:$0xff]
    %v104 = vld [vmem:[%s1 + $0x280] sm:$0xff]
    %v105 = vld [vmem:[%s1 + $0x288] sm:$0xff]
    %v106 = vld [vmem:[%s1 + $0x290] sm:$0xff]
    %v107 = vld [vmem:[%s1 + $0x298] sm:$0xff]
    %v108 = vld [vmem:[%s1 + $0x2a0] sm:$0xff]
    %v109 = vld [vmem:[%s1 + $0x2a8] sm:$0xff]
    %v110 = vld [vmem:[%s1 + $0x2b0] sm:$0xff]
    %v111 = vld [vmem:[%s1 + $0x2b8] sm:$0xff]
    %v112 = vld [vmem:[%s1 + $0x2c0] sm:$0xff]
    %v113 = vld [vmem:[%s1 + $0x2c8] sm:$0xff]
    %v114 = vld [vmem:[%s1 + $0x2d0] sm:$0xff]
    %v115 = vld [vmem:[%s1 + $0x2d8] sm:$0xff]
    %v116 = vld [vmem:[%s1 + $0x2e0] sm:$0xff]
    %v117 = vld [vmem:[%s1 + $0x2e8] sm:$0xff]
    %v118 = vld [vmem:[%s1 + $0x2f0] sm:$0xff]
    %v119 = vld [vmem:[%s1 + $0x2f8] sm:$0xff]
    %v120 = vld [vmem:[%s2] sm:$0x3]
    %v122 = vlaneseq
    %v123 = vshrl.u32 %v122, 7
    %v124 = vsub.s32 0, %v123
    %v125 = vrot.slane %v120, %v124
    %v126 = vlaneseq
    %v127 = vshrl.u32 %v126, 7
    %v128 = vsub.s32 1, %v127
    %v129 = vrot.slane %v120, %v128
    %v132 = vld [vmem:[#allocation2] sm:$0xff]
    %v133 = vld [vmem:[#allocation2 + $0x8] sm:$0xff]
    %v134 = vpack.c.bf16 %v132, %v132
    %v135 = vpack.c.bf16 %v133, %v133
    loop: start=0, step=1, limit=2
    $region18: #{encoder_forward.1} parent=1 // loop_pre_header
      _
    $region19: #{encoder_forward.1} parent=1 // loop_header
      %s137 = sphi 0, %s141
      %p138 = scmp.ge.s32.totalorder %s137, 2
      %v142 = vphi %v132, %v2073
      %v143 = vphi %v133, %v2074
      %v144 = vphi %v134, %v2080
      %v145 = vphi %v135, %v2081
    $region20: #{encoder_forward.1} parent=1 // loop_header_branch
      %140 = sbr.rel (%p138) target = $region24
    $region21: #{encoder_forward.1} parent=1 // loop_body
      %s146 = smul.u32 %s137, 8
      %s147 = smul.u32 %s146, 6
      %s148 = smul.addr %s147, 8
      %s149 = scalar_lea.vmem %s0, %s148
      %v150 = vld [vmem:[%s149] sm:$0xff]
      %v151 = vld [vmem:[%s149 + $0x8] sm:$0xff]
      %v152 = vld [vmem:[%s149 + $0x10] sm:$0xff]
      %v153 = vld [vmem:[%s149 + $0x18] sm:$0xff]
      %v154 = vld [vmem:[%s149 + $0x20] sm:$0xff]
      %v155 = vld [vmem:[%s149 + $0x28] sm:$0xff]
      %v220 = vunpack.c.l.b16 %v24
      %v221 = vunpack.c.h.b16 %v24
      %v222 = vunpack.c.l.b16 %v25
      %v223 = vunpack.c.h.b16 %v25
      %v224 = vunpack.c.l.b16 %v27
      %v225 = vunpack.c.h.b16 %v27
      %v226 = vunpack.c.l.b16 %v28
      %v227 = vunpack.c.h.b16 %v28
      %v228 = vunpack.c.l.b16 %v30
      %v229 = vunpack.c.h.b16 %v30
      %v230 = vunpack.c.l.b16 %v31
      %v231 = vunpack.c.h.b16 %v31
      %v232 = vunpack.c.l.b16 %v33
      %v233 = vunpack.c.h.b16 %v33
      %v234 = vunpack.c.l.b16 %v34
      %v235 = vunpack.c.h.b16 %v34
      %v236 = vunpack.c.l.b16 %v36
      %v237 = vunpack.c.h.b16 %v36
      %v238 = vunpack.c.l.b16 %v37
      %v239 = vunpack.c.h.b16 %v37
      %v240 = vunpack.c.l.b16 %v39
      %v241 = vunpack.c.h.b16 %v39
      %v242 = vunpack.c.l.b16 %v40
      %v243 = vunpack.c.h.b16 %v40
      %v244 = vunpack.c.l.b16 %v42
      %v245 = vunpack.c.h.b16 %v42
      %v246 = vunpack.c.l.b16 %v43
      %v247 = vunpack.c.h.b16 %v43
      %v248 = vunpack.c.l.b16 %v45
      %v249 = vunpack.c.h.b16 %v45
      %v250 = vunpack.c.l.b16 %v46
      %v251 = vunpack.c.h.b16 %v46
      %v252 = vunpack.c.l.b16 %v48
      %v253 = vunpack.c.h.b16 %v48
      %v254 = vunpack.c.l.b16 %v49
      %v255 = vunpack.c.h.b16 %v49
      %v256 = vunpack.c.l.b16 %v51
      %v257 = vunpack.c.h.b16 %v51
      %v258 = vunpack.c.l.b16 %v52
      %v259 = vunpack.c.h.b16 %v52
      %v260 = vunpack.c.l.b16 %v54
      %v261 = vunpack.c.h.b16 %v54
      %v262 = vunpack.c.l.b16 %v55
      %v263 = vunpack.c.h.b16 %v55
      %v264 = vunpack.c.l.b16 %v57
      %v265 = vunpack.c.h.b16 %v57
      %v266 = vunpack.c.l.b16 %v58
      %v267 = vunpack.c.h.b16 %v58
      %v268 = vunpack.c.l.b16 %v60
      %v269 = vunpack.c.h.b16 %v60
      %v270 = vunpack.c.l.b16 %v61
      %v271 = vunpack.c.h.b16 %v61
      %v272 = vunpack.c.l.b16 %v63
      %v273 = vunpack.c.h.b16 %v63
      %v274 = vunpack.c.l.b16 %v64
      %v275 = vunpack.c.h.b16 %v64
      %v276 = vunpack.c.l.b16 %v66
      %v277 = vunpack.c.h.b16 %v66
      %v278 = vunpack.c.l.b16 %v67
      %v279 = vunpack.c.h.b16 %v67
      %v280 = vunpack.c.l.b16 %v69
      %v281 = vunpack.c.h.b16 %v69
      %v282 = vunpack.c.l.b16 %v70
      %v283 = vunpack.c.h.b16 %v70
      %v284 = vunpack.c.l.b16 %v72
      %v285 = vunpack.c.h.b16 %v72
      %v286 = vunpack.c.l.b16 %v73
      %v287 = vunpack.c.h.b16 %v73
      %v288 = vunpack.c.l.b16 %v75
      %v289 = vunpack.c.h.b16 %v75
      %v290 = vunpack.c.l.b16 %v76
      %v291 = vunpack.c.h.b16 %v76
      %v292 = vunpack.c.l.b16 %v78
      %v293 = vunpack.c.h.b16 %v78
      %v294 = vunpack.c.l.b16 %v79
      %v295 = vunpack.c.h.b16 %v79
      %v296 = vunpack.c.l.b16 %v81
      %v297 = vunpack.c.h.b16 %v81
      %v298 = vunpack.c.l.b16 %v82
      %v299 = vunpack.c.h.b16 %v82
      %v300 = vunpack.c.l.b16 %v84
      %v301 = vunpack.c.h.b16 %v84
      %v302 = vunpack.c.l.b16 %v85
      %v303 = vunpack.c.h.b16 %v85
      %v304 = vunpack.c.l.b16 %v87
      %v305 = vunpack.c.h.b16 %v87
      %v306 = vunpack.c.l.b16 %v88
      %v307 = vunpack.c.h.b16 %v88
      %v308 = vunpack.c.l.b16 %v90
      %v309 = vunpack.c.h.b16 %v90
      %v310 = vunpack.c.l.b16 %v91
      %v311 = vunpack.c.h.b16 %v91
      %v312 = vunpack.c.l.b16 %v93
      %v313 = vunpack.c.h.b16 %v93
      %v314 = vunpack.c.l.b16 %v94
      %v315 = vunpack.c.h.b16 %v94
      %v316 = vunpack.c.l.b16 %v96
      %v317 = vunpack.c.h.b16 %v96
      %v318 = vunpack.c.l.b16 %v97
      %v319 = vunpack.c.h.b16 %v97
      %v320 = vunpack.c.l.b16 %v99
      %v321 = vunpack.c.h.b16 %v99
      %v322 = vunpack.c.l.b16 %v100
      %v323 = vunpack.c.h.b16 %v100
      %v324 = vunpack.c.l.b16 %v102
      %v325 = vunpack.c.h.b16 %v102
      %v326 = vunpack.c.l.b16 %v103
      %v327 = vunpack.c.h.b16 %v103
      %v328 = vunpack.c.l.b16 %v105
      %v329 = vunpack.c.h.b16 %v105
      %v330 = vunpack.c.l.b16 %v106
      %v331 = vunpack.c.h.b16 %v106
      %v332 = vunpack.c.l.b16 %v108
      %v333 = vunpack.c.h.b16 %v108
      %v334 = vunpack.c.l.b16 %v109
      %v335 = vunpack.c.h.b16 %v109
      %v336 = vunpack.c.l.b16 %v111
      %v337 = vunpack.c.h.b16 %v111
      %v338 = vunpack.c.l.b16 %v112
      %v339 = vunpack.c.h.b16 %v112
      %v340 = vunpack.c.l.b16 %v114
      %v341 = vunpack.c.h.b16 %v114
      %v342 = vunpack.c.l.b16 %v115
      %v343 = vunpack.c.h.b16 %v115
      %v344 = vunpack.c.l.b16 %v117
      %v345 = vunpack.c.h.b16 %v117
      %v346 = vunpack.c.l.b16 %v118
      %v347 = vunpack.c.h.b16 %v118
      %v348 = vpack.c.b16 %v224, %v220
      %v349 = vpack.c.b16 %v225, %v221
      %v350 = vpack.c.b16 %v226, %v222
      %v351 = vpack.c.b16 %v227, %v223
      %v352 = vpack.c.b16 %v232, %v228
      %v353 = vpack.c.b16 %v233, %v229
      %v354 = vpack.c.b16 %v234, %v230
      %v355 = vpack.c.b16 %v235, %v231
      %v356 = vpack.c.b16 %v240, %v236
      %v357 = vpack.c.b16 %v241, %v237
      %v358 = vpack.c.b16 %v242, %v238
      %v359 = vpack.c.b16 %v243, %v239
      %v360 = vpack.c.b16 %v248, %v244
      %v361 = vpack.c.b16 %v249, %v245
      %v362 = vpack.c.b16 %v250, %v246
      %v363 = vpack.c.b16 %v251, %v247
      %v364 = vpack.c.b16 %v256, %v252
      %v365 = vpack.c.b16 %v257, %v253
      %v366 = vpack.c.b16 %v258, %v254
      %v367 = vpack.c.b16 %v259, %v255
      %v368 = vpack.c.b16 %v264, %v260
      %v369 = vpack.c.b16 %v265, %v261
      %v370 = vpack.c.b16 %v266, %v262
      %v371 = vpack.c.b16 %v267, %v263
      %v372 = vpack.c.b16 %v272, %v268
      %v373 = vpack.c.b16 %v273, %v269
      %v374 = vpack.c.b16 %v274, %v270
      %v375 = vpack.c.b16 %v275, %v271
      %v376 = vpack.c.b16 %v280, %v276
      %v377 = vpack.c.b16 %v281, %v277
      %v378 = vpack.c.b16 %v282, %v278
      %v379 = vpack.c.b16 %v283, %v279
      %v380 = vpack.c.b16 %v288, %v284
      %v381 = vpack.c.b16 %v289, %v285
      %v382 = vpack.c.b16 %v290, %v286
      %v383 = vpack.c.b16 %v291, %v287
      %v384 = vpack.c.b16 %v296, %v292
      %v385 = vpack.c.b16 %v297, %v293
      %v386 = vpack.c.b16 %v298, %v294
      %v387 = vpack.c.b16 %v299, %v295
      %v388 = vpack.c.b16 %v304, %v300
      %v389 = vpack.c.b16 %v305, %v301
      %v390 = vpack.c.b16 %v306, %v302
      %v391 = vpack.c.b16 %v307, %v303
      %v392 = vpack.c.b16 %v312, %v308
      %v393 = vpack.c.b16 %v313, %v309
      %v394 = vpack.c.b16 %v314, %v310
      %v395 = vpack.c.b16 %v315, %v311
      %v396 = vpack.c.b16 %v320, %v316
      %v397 = vpack.c.b16 %v321, %v317
      %v398 = vpack.c.b16 %v322, %v318
      %v399 = vpack.c.b16 %v323, %v319
      %v400 = vpack.c.b16 %v328, %v324
      %v401 = vpack.c.b16 %v329, %v325
      %v402 = vpack.c.b16 %v330, %v326
      %v403 = vpack.c.b16 %v331, %v327
      %v404 = vpack.c.b16 %v336, %v332
      %v405 = vpack.c.b16 %v337, %v333
      %v406 = vpack.c.b16 %v338, %v334
      %v407 = vpack.c.b16 %v339, %v335
      %v408 = vpack.c.b16 %v344, %v340
      %v409 = vpack.c.b16 %v345, %v341
      %v410 = vpack.c.b16 %v346, %v342
      %v411 = vpack.c.b16 %v347, %v343
      %476 = vmatprep.subr.bf16.mxu0 %v349
      %477 = vmatpush1.bf16.msra.mxu0 %v348
      %478 = vmatprep.subr.bf16.mxu0 %v353
      %479 = vmatpush1.bf16.msra.mxu0 %v352
      %480 = vmatprep.subr.bf16.mxu0 %v357
      %481 = vmatpush1.bf16.msra.mxu0 %v356
      %482 = vmatprep.subr.bf16.mxu0 %v361
      %483 = vmatpush1.bf16.msra.mxu0 %v360
      %484 = vmatprep.subr.bf16.mxu0 %v365
      %485 = vmatpush1.bf16.msra.mxu0 %v364
      %486 = vmatprep.subr.bf16.mxu0 %v369
      %487 = vmatpush1.bf16.msra.mxu0 %v368
      %488 = vmatprep.subr.bf16.mxu0 %v373
      %489 = vmatpush1.bf16.msra.mxu0 %v372
      %490 = vmatprep.subr.bf16.mxu0 %v377
      %491 = vmatpush1.bf16.msra.mxu0 %v376
      %492 = vmatprep.subr.bf16.mxu0 %v381
      %493 = vmatpush1.bf16.msra.mxu0 %v380
      %494 = vmatprep.subr.bf16.mxu0 %v385
      %495 = vmatpush1.bf16.msra.mxu0 %v384
      %496 = vmatprep.subr.bf16.mxu0 %v389
      %497 = vmatpush1.bf16.msra.mxu0 %v388
      %498 = vmatprep.subr.bf16.mxu0 %v393
      %499 = vmatpush1.bf16.msra.mxu0 %v392
      %500 = vmatprep.subr.bf16.mxu0 %v397
      %501 = vmatpush1.bf16.msra.mxu0 %v396
      %502 = vmatprep.subr.bf16.mxu0 %v401
      %503 = vmatpush1.bf16.msra.mxu0 %v400
      %504 = vmatprep.subr.bf16.mxu0 %v405
      %505 = vmatpush1.bf16.msra.mxu0 %v404
      %506 = vmatprep.subr.bf16.mxu0 %v409
      %507 = vmatpush1.bf16.msra.mxu0 %v408
      %508 = vmatprep.mubr.bf16.mxu0 %v145
      %509 = vmatmul.mubr.bf16.gmra.mrb[0].mxu0 %v144
      %v510 = vpop.f32.mrb[0].mxu0
      %v511 = vadd.f32 0.0, %v510
      %v512 = vpop.f32.mrb[0].mxu0
      %v513 = vadd.f32 0.0, %v512
      %v514 = vpop.f32.mrb[0].mxu0
      %v515 = vpop.f32.mrb[0].mxu0
      %516 = vdwg.mxu0
      %517 = vmatprep.subr.bf16.mxu0 %v351
      %518 = vmatpush1.bf16.msra.mxu0 %v350
      %519 = vmatprep.subr.bf16.mxu0 %v355
      %520 = vmatpush1.bf16.msra.mxu0 %v354
      %521 = vmatprep.subr.bf16.mxu0 %v359
      %522 = vmatpush1.bf16.msra.mxu0 %v358
      %523 = vmatprep.subr.bf16.mxu0 %v363
      %524 = vmatpush1.bf16.msra.mxu0 %v362
      %525 = vmatprep.subr.bf16.mxu0 %v367
      %526 = vmatpush1.bf16.msra.mxu0 %v366
      %527 = vmatprep.subr.bf16.mxu0 %v371
      %528 = vmatpush1.bf16.msra.mxu0 %v370
      %529 = vmatprep.subr.bf16.mxu0 %v375
      %530 = vmatpush1.bf16.msra.mxu0 %v374
      %531 = vmatprep.subr.bf16.mxu0 %v379
      %532 = vmatpush1.bf16.msra.mxu0 %v378
      %533 = vmatprep.subr.bf16.mxu0 %v383
      %534 = vmatpush1.bf16.msra.mxu0 %v382
      %535 = vmatprep.subr.bf16.mxu0 %v387
      %536 = vmatpush1.bf16.msra.mxu0 %v386
      %537 = vmatprep.subr.bf16.mxu0 %v391
      %538 = vmatpush1.bf16.msra.mxu0 %v390
      %539 = vmatprep.subr.bf16.mxu0 %v395
      %540 = vmatpush1.bf16.msra.mxu0 %v394
      %541 = vmatprep.subr.bf16.mxu0 %v399
      %542 = vmatpush1.bf16.msra.mxu0 %v398
      %543 = vmatprep.subr.bf16.mxu0 %v403
      %544 = vmatpush1.bf16.msra.mxu0 %v402
      %545 = vmatprep.subr.bf16.mxu0 %v407
      %546 = vmatpush1.bf16.msra.mxu0 %v406
      %547 = vmatprep.subr.bf16.mxu0 %v411
      %548 = vmatpush1.bf16.msra.mxu0 %v410
      %549 = vmatprep.mubr.bf16.mxu0 %v145
      %550 = vmatmul.mubr.bf16.gmra.mrb[0].mxu0 %v144
      %v551 = vpop.f32.mrb[0].mxu0
      %v552 = vadd.f32 0.0, %v551
      %v553 = vpop.f32.mrb[0].mxu0
      %v554 = vadd.f32 0.0, %v553
      %v555 = vpop.f32.mrb[0].mxu0
      %v556 = vpop.f32.mrb[0].mxu0
      %557 = vdwg.mxu0
      %v558 = vadd.f32 %v150, %v511
      %v559 = vadd.f32 %v151, %v513
      %v560 = vxor.u32 %v558, 2147483648
      %v561 = vxor.u32 %v559, 2147483648
      %v562 = vmul.f32 %v560, 1.442695
      %v563 = vpow.pop %v562
      %v564 = vmul.f32 %v561, 1.442695
      %v565 = vpow.pop %v564
      %v566 = vadd.f32 %v563, 1.0
      %v567 = vadd.f32 %v565, 1.0
      %v568 = vrcp.pop %v566
      %v569 = vmul.f32 1.0, %v568
      %v570 = vrcp.pop %v567
      %v571 = vmul.f32 1.0, %v570
      %v572 = vadd.f32 %v152, %v552
      %v573 = vadd.f32 %v153, %v554
      %v574 = vxor.u32 %v572, 2147483648
      %v575 = vxor.u32 %v573, 2147483648
      %v576 = vmul.f32 %v574, 1.442695
      %v577 = vpow.pop %v576
      %v578 = vmul.f32 %v575, 1.442695
      %v579 = vpow.pop %v578
      %v580 = vadd.f32 %v577, 1.0
      %v581 = vadd.f32 %v579, 1.0
      %v582 = vrcp.pop %v580
      %v583 = vmul.f32 1.0, %v582
      %v584 = vrcp.pop %v581
      %v585 = vmul.f32 1.0, %v584
      %v618 = vunpack.c.l.b16 %v26
      %v619 = vunpack.c.h.b16 %v26
      %v620 = vunpack.c.l.b16 %v29
      %v621 = vunpack.c.h.b16 %v29
      %v622 = vunpack.c.l.b16 %v32
      %v623 = vunpack.c.h.b16 %v32
      %v624 = vunpack.c.l.b16 %v35
      %v625 = vunpack.c.h.b16 %v35
      %v626 = vunpack.c.l.b16 %v38
      %v627 = vunpack.c.h.b16 %v38
      %v628 = vunpack.c.l.b16 %v41
      %v629 = vunpack.c.h.b16 %v41
      %v630 = vunpack.c.l.b16 %v44
      %v631 = vunpack.c.h.b16 %v44
      %v632 = vunpack.c.l.b16 %v47
      %v633 = vunpack.c.h.b16 %v47
      %v634 = vunpack.c.l.b16 %v50
      %v635 = vunpack.c.h.b16 %v50
      %v636 = vunpack.c.l.b16 %v53
      %v637 = vunpack.c.h.b16 %v53
      %v638 = vunpack.c.l.b16 %v56
      %v639 = vunpack.c.h.b16 %v56
      %v640 = vunpack.c.l.b16 %v59
      %v641 = vunpack.c.h.b16 %v59
      %v642 = vunpack.c.l.b16 %v62
      %v643 = vunpack.c.h.b16 %v62
      %v644 = vunpack.c.l.b16 %v65
      %v645 = vunpack.c.h.b16 %v65
      %v646 = vunpack.c.l.b16 %v68
      %v647 = vunpack.c.h.b16 %v68
      %v648 = vunpack.c.l.b16 %v71
      %v649 = vunpack.c.h.b16 %v71
      %v650 = vunpack.c.l.b16 %v74
      %v651 = vunpack.c.h.b16 %v74
      %v652 = vunpack.c.l.b16 %v77
      %v653 = vunpack.c.h.b16 %v77
      %v654 = vunpack.c.l.b16 %v80
      %v655 = vunpack.c.h.b16 %v80
      %v656 = vunpack.c.l.b16 %v83
      %v657 = vunpack.c.h.b16 %v83
      %v658 = vunpack.c.l.b16 %v86
      %v659 = vunpack.c.h.b16 %v86
      %v660 = vunpack.c.l.b16 %v89
      %v661 = vunpack.c.h.b16 %v89
      %v662 = vunpack.c.l.b16 %v92
      %v663 = vunpack.c.h.b16 %v92
      %v664 = vunpack.c.l.b16 %v95
      %v665 = vunpack.c.h.b16 %v95
      %v666 = vunpack.c.l.b16 %v98
      %v667 = vunpack.c.h.b16 %v98
      %v668 = vunpack.c.l.b16 %v101
      %v669 = vunpack.c.h.b16 %v101
      %v670 = vunpack.c.l.b16 %v104
      %v671 = vunpack.c.h.b16 %v104
      %v672 = vunpack.c.l.b16 %v107
      %v673 = vunpack.c.h.b16 %v107
      %v674 = vunpack.c.l.b16 %v110
      %v675 = vunpack.c.h.b16 %v110
      %v676 = vunpack.c.l.b16 %v113
      %v677 = vunpack.c.h.b16 %v113
      %v678 = vunpack.c.l.b16 %v116
      %v679 = vunpack.c.h.b16 %v116
      %v680 = vunpack.c.l.b16 %v119
      %v681 = vunpack.c.h.b16 %v119
      %v682 = vpack.c.b16 %v620, %v618
      %v683 = vpack.c.b16 %v621, %v619
      %v684 = vpack.c.b16 %v624, %v622
      %v685 = vpack.c.b16 %v625, %v623
      %v686 = vpack.c.b16 %v628, %v626
      %v687 = vpack.c.b16 %v629, %v627
      %v688 = vpack.c.b16 %v632, %v630
      %v689 = vpack.c.b16 %v633, %v631
      %v690 = vpack.c.b16 %v636, %v634
      %v691 = vpack.c.b16 %v637, %v635
      %v692 = vpack.c.b16 %v640, %v638
      %v693 = vpack.c.b16 %v641, %v639
      %v694 = vpack.c.b16 %v644, %v642
      %v695 = vpack.c.b16 %v645, %v643
      %v696 = vpack.c.b16 %v648, %v646
      %v697 = vpack.c.b16 %v649, %v647
      %v698 = vpack.c.b16 %v652, %v650
      %v699 = vpack.c.b16 %v653, %v651
      %v700 = vpack.c.b16 %v656, %v654
      %v701 = vpack.c.b16 %v657, %v655
      %v702 = vpack.c.b16 %v660, %v658
      %v703 = vpack.c.b16 %v661, %v659
      %v704 = vpack.c.b16 %v664, %v662
      %v705 = vpack.c.b16 %v665, %v663
      %v706 = vpack.c.b16 %v668, %v666
      %v707 = vpack.c.b16 %v669, %v667
      %v708 = vpack.c.b16 %v672, %v670
      %v709 = vpack.c.b16 %v673, %v671
      %v710 = vpack.c.b16 %v676, %v674
      %v711 = vpack.c.b16 %v677, %v675
      %v712 = vpack.c.b16 %v680, %v678
      %v713 = vpack.c.b16 %v681, %v679
      %746 = vmatprep.subr.bf16.mxu0 %v683
      %747 = vmatpush1.bf16.msra.mxu0 %v682
      %748 = vmatprep.subr.bf16.mxu0 %v685
      %749 = vmatpush1.bf16.msra.mxu0 %v684
      %750 = vmatprep.subr.bf16.mxu0 %v687
      %751 = vmatpush1.bf16.msra.mxu0 %v686
      %752 = vmatprep.subr.bf16.mxu0 %v689
      %753 = vmatpush1.bf16.msra.mxu0 %v688
      %754 = vmatprep.subr.bf16.mxu0 %v691
      %755 = vmatpush1.bf16.msra.mxu0 %v690
      %756 = vmatprep.subr.bf16.mxu0 %v693
      %757 = vmatpush1.bf16.msra.mxu0 %v692
      %758 = vmatprep.subr.bf16.mxu0 %v695
      %759 = vmatpush1.bf16.msra.mxu0 %v694
      %760 = vmatprep.subr.bf16.mxu0 %v697
      %761 = vmatpush1.bf16.msra.mxu0 %v696
      %762 = vmatprep.subr.bf16.mxu0 %v699
      %763 = vmatpush1.bf16.msra.mxu0 %v698
      %764 = vmatprep.subr.bf16.mxu0 %v701
      %765 = vmatpush1.bf16.msra.mxu0 %v700
      %766 = vmatprep.subr.bf16.mxu0 %v703
      %767 = vmatpush1.bf16.msra.mxu0 %v702
      %768 = vmatprep.subr.bf16.mxu0 %v705
      %769 = vmatpush1.bf16.msra.mxu0 %v704
      %770 = vmatprep.subr.bf16.mxu0 %v707
      %771 = vmatpush1.bf16.msra.mxu0 %v706
      %772 = vmatprep.subr.bf16.mxu0 %v709
      %773 = vmatpush1.bf16.msra.mxu0 %v708
      %774 = vmatprep.subr.bf16.mxu0 %v711
      %775 = vmatpush1.bf16.msra.mxu0 %v710
      %776 = vmatprep.subr.bf16.mxu0 %v713
      %777 = vmatpush1.bf16.msra.mxu0 %v712
      %778 = vmatprep.mubr.bf16.mxu0 %v145
      %779 = vmatmul.mubr.bf16.gmra.mrb[0].mxu0 %v144
      %v780 = vpop.f32.mrb[0].mxu0
      %v781 = vadd.f32 %v125, %v780
      %v782 = vpop.f32.mrb[0].mxu0
      %v783 = vadd.f32 %v129, %v782
      %v784 = vpop.f32.mrb[0].mxu0
      %v785 = vpop.f32.mrb[0].mxu0
      %786 = vdwg.mxu0
      %v787 = vmul.f32 %v569, %v781
      %v788 = vmul.f32 %v571, %v783
      %v789 = vadd.f32 %v154, %v787
      %v790 = vadd.f32 %v155, %v788
      %v791 = vtanh.pop %v789
      %v792 = vtanh.pop %v790
      %v793 = vsub.f32 1.0, %v583
      %v794 = vsub.f32 1.0, %v585
      %v795 = vmul.f32 %v793, %v791
      %v796 = vmul.f32 %v794, %v792
      %v797 = vmul.f32 %v583, %v142
      %v798 = vmul.f32 %v585, %v143
      %v799 = vadd.f32 %v795, %v797
      %v800 = vadd.f32 %v796, %v798
      %s801 = smul.u32 %s146, 2
      %s802 = smul.addr %s801, 8
      %s803 = scalar_lea.vmem [#allocation3], %s802
      %804 = vst [vmem:[%s803] sm:$0xff] %v799
      %805 = vst [vmem:[%s803 + $0x8] sm:$0xff] %v800
      %v806 = vpack.c.bf16 %v799, %v799
      %v807 = vpack.c.bf16 %v800, %v800
      %s808 = sadd.s32 %s146, 1
      %s809 = smul.u32 %s808, 6
      %s810 = smul.addr %s809, 8
      %s811 = scalar_lea.vmem %s0, %s810
      %v812 = vld [vmem:[%s811] sm:$0xff]
      %v813 = vld [vmem:[%s811 + $0x8] sm:$0xff]
      %v814 = vld [vmem:[%s811 + $0x10] sm:$0xff]
      %v815 = vld [vmem:[%s811 + $0x18] sm:$0xff]
      %v816 = vld [vmem:[%s811 + $0x20] sm:$0xff]
      %v817 = vld [vmem:[%s811 + $0x28] sm:$0xff]
      %818 = vmatprep.subr.bf16.mxu0 %v349
      %819 = vmatpush1.bf16.msra.mxu0 %v348
      %820 = vmatprep.subr.bf16.mxu0 %v353
      %821 = vmatpush1.bf16.msra.mxu0 %v352
      %822 = vmatprep.subr.bf16.mxu0 %v357
      %823 = vmatpush1.bf16.msra.mxu0 %v356
      %824 = vmatprep.subr.bf16.mxu0 %v361
      %825 = vmatpush1.bf16.msra.mxu0 %v360
      %826 = vmatprep.subr.bf16.mxu0 %v365
      %827 = vmatpush1.bf16.msra.mxu0 %v364
      %828 = vmatprep.subr.bf16.mxu0 %v369
      %829 = vmatpush1.bf16.msra.mxu0 %v368
      %830 = vmatprep.subr.bf16.mxu0 %v373
      %831 = vmatpush1.bf16.msra.mxu0 %v372
      %832 = vmatprep.subr.bf16.mxu0 %v377
      %833 = vmatpush1.bf16.msra.mxu0 %v376
      %834 = vmatprep.subr.bf16.mxu0 %v381
      %835 = vmatpush1.bf16.msra.mxu0 %v380
      %836 = vmatprep.subr.bf16.mxu0 %v385
      %837 = vmatpush1.bf16.msra.mxu0 %v384
      %838 = vmatprep.subr.bf16.mxu0 %v389
      %839 = vmatpush1.bf16.msra.mxu0 %v388
      %840 = vmatprep.subr.bf16.mxu0 %v393
      %841 = vmatpush1.bf16.msra.mxu0 %v392
      %842 = vmatprep.subr.bf16.mxu0 %v397
      %843 = vmatpush1.bf16.msra.mxu0 %v396
      %844 = vmatprep.subr.bf16.mxu0 %v401
      %845 = vmatpush1.bf16.msra.mxu0 %v400
      %846 = vmatprep.subr.bf16.mxu0 %v405
      %847 = vmatpush1.bf16.msra.mxu0 %v404
      %848 = vmatprep.subr.bf16.mxu0 %v409
      %849 = vmatpush1.bf16.msra.mxu0 %v408
      %850 = vmatprep.mubr.bf16.mxu0 %v807
      %851 = vmatmul.mubr.bf16.gmra.mrb[0].mxu0 %v806
      %v852 = vpop.f32.mrb[0].mxu0
      %v853 = vadd.f32 0.0, %v852
      %v854 = vpop.f32.mrb[0].mxu0
      %v855 = vadd.f32 0.0, %v854
      %v856 = vpop.f32.mrb[0].mxu0
      %v857 = vpop.f32.mrb[0].mxu0
      %858 = vdwg.mxu0
      %859 = vmatprep.subr.bf16.mxu0 %v351
      %860 = vmatpush1.bf16.msra.mxu0 %v350
      %861 = vmatprep.subr.bf16.mxu0 %v355
      %862 = vmatpush1.bf16.msra.mxu0 %v354
      %863 = vmatprep.subr.bf16.mxu0 %v359
      %864 = vmatpush1.bf16.msra.mxu0 %v358
      %865 = vmatprep.subr.bf16.mxu0 %v363
      %866 = vmatpush1.bf16.msra.mxu0 %v362
      %867 = vmatprep.subr.bf16.mxu0 %v367
      %868 = vmatpush1.bf16.msra.mxu0 %v366
      %869 = vmatprep.subr.bf16.mxu0 %v371
      %870 = vmatpush1.bf16.msra.mxu0 %v370
      %871 = vmatprep.subr.bf16.mxu0 %v375
      %872 = vmatpush1.bf16.msra.mxu0 %v374
      %873 = vmatprep.subr.bf16.mxu0 %v379
      %874 = vmatpush1.bf16.msra.mxu0 %v378
      %875 = vmatprep.subr.bf16.mxu0 %v383
      %876 = vmatpush1.bf16.msra.mxu0 %v382
      %877 = vmatprep.subr.bf16.mxu0 %v387
      %878 = vmatpush1.bf16.msra.mxu0 %v386
      %879 = vmatprep.subr.bf16.mxu0 %v391
      %880 = vmatpush1.bf16.msra.mxu0 %v390
      %881 = vmatprep.subr.bf16.mxu0 %v395
      %882 = vmatpush1.bf16.msra.mxu0 %v394
      %883 = vmatprep.subr.bf16.mxu0 %v399
      %884 = vmatpush1.bf16.msra.mxu0 %v398
      %885 = vmatprep.subr.bf16.mxu0 %v403
      %886 = vmatpush1.bf16.msra.mxu0 %v402
      %887 = vmatprep.subr.bf16.mxu0 %v407
      %888 = vmatpush1.bf16.msra.mxu0 %v406
      %889 = vmatprep.subr.bf16.mxu0 %v411
      %890 = vmatpush1.bf16.msra.mxu0 %v410
      %891 = vmatprep.mubr.bf16.mxu0 %v807
      %892 = vmatmul.mubr.bf16.gmra.mrb[0].mxu0 %v806
      %v893 = vpop.f32.mrb[0].mxu0
      %v894 = vadd.f32 0.0, %v893
      %v895 = vpop.f32.mrb[0].mxu0
      %v896 = vadd.f32 0.0, %v895
      %v897 = vpop.f32.mrb[0].mxu0
      %v898 = vpop.f32.mrb[0].mxu0
      %899 = vdwg.mxu0
      %v900 = vadd.f32 %v812, %v853
      %v901 = vadd.f32 %v813, %v855
      %v902 = vxor.u32 %v900, 2147483648
      %v903 = vxor.u32 %v901, 2147483648
      %v904 = vmul.f32 %v902, 1.442695
      %v905 = vpow.pop %v904
      %v906 = vmul.f32 %v903, 1.442695
      %v907 = vpow.pop %v906
      %v908 = vadd.f32 %v905, 1.0
      %v909 = vadd.f32 %v907, 1.0
      %v910 = vrcp.pop %v908
      %v911 = vmul.f32 1.0, %v910
      %v912 = vrcp.pop %v909
      %v913 = vmul.f32 1.0, %v912
      %v914 = vadd.f32 %v814, %v894
      %v915 = vadd.f32 %v815, %v896
      %v916 = vxor.u32 %v914, 2147483648
      %v917 = vxor.u32 %v915, 2147483648
      %v918 = vmul.f32 %v916, 1.442695
      %v919 = vpow.pop %v918
      %v920 = vmul.f32 %v917, 1.442695
      %v921 = vpow.pop %v920
      %v922 = vadd.f32 %v919, 1.0
      %v923 = vadd.f32 %v921, 1.0
      %v924 = vrcp.pop %v922
      %v925 = vmul.f32 1.0, %v924
      %v926 = vrcp.pop %v923
      %v927 = vmul.f32 1.0, %v926
      %928 = vmatprep.subr.bf16.mxu0 %v683
      %929 = vmatpush1.bf16.msra.mxu0 %v682
      %930 = vmatprep.subr.bf16.mxu0 %v685
      %931 = vmatpush1.bf16.msra.mxu0 %v684
      %932 = vmatprep.subr.bf16.mxu0 %v687
      %933 = vmatpush1.bf16.msra.mxu0 %v686
      %934 = vmatprep.subr.bf16.mxu0 %v689
      %935 = vmatpush1.bf16.msra.mxu0 %v688
      %936 = vmatprep.subr.bf16.mxu0 %v691
      %937 = vmatpush1.bf16.msra.mxu0 %v690
      %938 = vmatprep.subr.bf16.mxu0 %v693
      %939 = vmatpush1.bf16.msra.mxu0 %v692
      %940 = vmatprep.subr.bf16.mxu0 %v695
      %941 = vmatpush1.bf16.msra.mxu0 %v694
      %942 = vmatprep.subr.bf16.mxu0 %v697
      %943 = vmatpush1.bf16.msra.mxu0 %v696
      %944 = vmatprep.subr.bf16.mxu0 %v699
      %945 = vmatpush1.bf16.msra.mxu0 %v698
      %946 = vmatprep.subr.bf16.mxu0 %v701
      %947 = vmatpush1.bf16.msra.mxu0 %v700
      %948 = vmatprep.subr.bf16.mxu0 %v703
      %949 = vmatpush1.bf16.msra.mxu0 %v702
      %950 = vmatprep.subr.bf16.mxu0 %v705
      %951 = vmatpush1.bf16.msra.mxu0 %v704
      %952 = vmatprep.subr.bf16.mxu0 %v707
      %953 = vmatpush1.bf16.msra.mxu0 %v706
      %954 = vmatprep.subr.bf16.mxu0 %v709
      %955 = vmatpush1.bf16.msra.mxu0 %v708
      %956 = vmatprep.subr.bf16.mxu0 %v711
      %957 = vmatpush1.bf16.msra.mxu0 %v710
      %958 = vmatprep.subr.bf16.mxu0 %v713
      %959 = vmatpush1.bf16.msra.mxu0 %v712
      %960 = vmatprep.mubr.bf16.mxu0 %v807
      %961 = vmatmul.mubr.bf16.gmra.mrb[0].mxu0 %v806
      %v962 = vpop.f32.mrb[0].mxu0
      %v963 = vadd.f32 %v125, %v962
      %v964 = vpop.f32.mrb[0].mxu0
      %v965 = vadd.f32 %v129, %v964
      %v966 = vpop.f32.mrb[0].mxu0
      %v967 = vpop.f32.mrb[0].mxu0
      %968 = vdwg.mxu0
      %v969 = vmul.f32 %v911, %v963
      %v970 = vmul.f32 %v913, %v965
      %v971 = vadd.f32 %v816, %v969
      %v972 = vadd.f32 %v817, %v970
      %v973 = vtanh.pop %v971
      %v974 = vtanh.pop %v972
      %v975 = vsub.f32 1.0, %v925
      %v976 = vsub.f32 1.0, %v927
      %v977 = vmul.f32 %v975, %v973
      %v978 = vmul.f32 %v976, %v974
      %v979 = vmul.f32 %v925, %v799
      %v980 = vmul.f32 %v927, %v800
      %v981 = vadd.f32 %v977, %v979
      %v982 = vadd.f32 %v978, %v980
      %s983 = smul.u32 %s808, 2
      %s984 = smul.addr %s983, 8
      %s985 = scalar_lea.vmem [#allocation3], %s984
      %986 = vst [vmem:[%s985] sm:$0xff] %v981
      %987 = vst [vmem:[%s985 + $0x8] sm:$0xff] %v982
      %v988 = vpack.c.bf16 %v981, %v981
      %v989 = vpack.c.bf16 %v982, %v982
      %s990 = sadd.s32 %s146, 2
      %s991 = smul.u32 %s990, 6
      %s992 = smul.addr %s991, 8
      %s993 = scalar_lea.vmem %s0, %s992
      %v994 = vld [vmem:[%s993] sm:$0xff]
      %v995 = vld [vmem:[%s993 + $0x8] sm:$0xff]
      %v996 = vld [vmem:[%s993 + $0x10] sm:$0xff]
      %v997 = vld [vmem:[%s993 + $0x18] sm:$0xff]
      %v998 = vld [vmem:[%s993 + $0x20] sm:$0xff]
      %v999 = vld [vmem:[%s993 + $0x28] sm:$0xff]
      %1000 = vmatprep.subr.bf16.mxu0 %v349
      %1001 = vmatpush1.bf16.msra.mxu0 %v348
      %1002 = vmatprep.subr.bf16.mxu0 %v353
      %1003 = vmatpush1.bf16.msra.mxu0 %v352
      %1004 = vmatprep.subr.bf16.mxu0 %v357
      %1005 = vmatpush1.bf16.msra.mxu0 %v356
      %1006 = vmatprep.subr.bf16.mxu0 %v361
      %1007 = vmatpush1.bf16.msra.mxu0 %v360
      %1008 = vmatprep.subr.bf16.mxu0 %v365
      %1009 = vmatpush1.bf16.msra.mxu0 %v364
      %1010 = vmatprep.subr.bf16.mxu0 %v369
      %1011 = vmatpush1.bf16.msra.mxu0 %v368
      %1012 = vmatprep.subr.bf16.mxu0 %v373
      %1013 = vmatpush1.bf16.msra.mxu0 %v372
      %1014 = vmatprep.subr.bf16.mxu0 %v377
      %1015 = vmatpush1.bf16.msra.mxu0 %v376
      %1016 = vmatprep.subr.bf16.mxu0 %v381
      %1017 = vmatpush1.bf16.msra.mxu0 %v380
      %1018 = vmatprep.subr.bf16.mxu0 %v385
      %1019 = vmatpush1.bf16.msra.mxu0 %v384
      %1020 = vmatprep.subr.bf16.mxu0 %v389
      %1021 = vmatpush1.bf16.msra.mxu0 %v388
      %1022 = vmatprep.subr.bf16.mxu0 %v393
      %1023 = vmatpush1.bf16.msra.mxu0 %v392
      %1024 = vmatprep.subr.bf16.mxu0 %v397
      %1025 = vmatpush1.bf16.msra.mxu0 %v396
      %1026 = vmatprep.subr.bf16.mxu0 %v401
      %1027 = vmatpush1.bf16.msra.mxu0 %v400
      %1028 = vmatprep.subr.bf16.mxu0 %v405
      %1029 = vmatpush1.bf16.msra.mxu0 %v404
      %1030 = vmatprep.subr.bf16.mxu0 %v409
      %1031 = vmatpush1.bf16.msra.mxu0 %v408
      %1032 = vmatprep.mubr.bf16.mxu0 %v989
      %1033 = vmatmul.mubr.bf16.gmra.mrb[0].mxu0 %v988
      %v1034 = vpop.f32.mrb[0].mxu0
      %v1035 = vadd.f32 0.0, %v1034
      %v1036 = vpop.f32.mrb[0].mxu0
      %v1037 = vadd.f32 0.0, %v1036
      %v1038 = vpop.f32.mrb[0].mxu0
      %v1039 = vpop.f32.mrb[0].mxu0
      %1040 = vdwg.mxu0
      %1041 = vmatprep.subr.bf16.mxu0 %v351
      %1042 = vmatpush1.bf16.msra.mxu0 %v350
      %1043 = vmatprep.subr.bf16.mxu0 %v355
      %1044 = vmatpush1.bf16.msra.mxu0 %v354
      %1045 = vmatprep.subr.bf16.mxu0 %v359
      %1046 = vmatpush1.bf16.msra.mxu0 %v358
      %1047 = vmatprep.subr.bf16.mxu0 %v363
      %1048 = vmatpush1.bf16.msra.mxu0 %v362
      %1049 = vmatprep.subr.bf16.mxu0 %v367
      %1050 = vmatpush1.bf16.msra.mxu0 %v366
      %1051 = vmatprep.subr.bf16.mxu0 %v371
      %1052 = vmatpush1.bf16.msra.mxu0 %v370
      %1053 = vmatprep.subr.bf16.mxu0 %v375
      %1054 = vmatpush1.bf16.msra.mxu0 %v374
      %1055 = vmatprep.subr.bf16.mxu0 %v379
      %1056 = vmatpush1.bf16.msra.mxu0 %v378
      %1057 = vmatprep.subr.bf16.mxu0 %v383
      %1058 = vmatpush1.bf16.msra.mxu0 %v382
      %1059 = vmatprep.subr.bf16.mxu0 %v387
      %1060 = vmatpush1.bf16.msra.mxu0 %v386
      %1061 = vmatprep.subr.bf16.mxu0 %v391
      %1062 = vmatpush1.bf16.msra.mxu0 %v390
      %1063 = vmatprep.subr.bf16.mxu0 %v395
      %1064 = vmatpush1.bf16.msra.mxu0 %v394
      %1065 = vmatprep.subr.bf16.mxu0 %v399
      %1066 = vmatpush1.bf16.msra.mxu0 %v398
      %1067 = vmatprep.subr.bf16.mxu0 %v403
      %1068 = vmatpush1.bf16.msra.mxu0 %v402
      %1069 = vmatprep.subr.bf16.mxu0 %v407
      %1070 = vmatpush1.bf16.msra.mxu0 %v406
      %1071 = vmatprep.subr.bf16.mxu0 %v411
      %1072 = vmatpush1.bf16.msra.mxu0 %v410
      %1073 = vmatprep.mubr.bf16.mxu0 %v989
      %1074 = vmatmul.mubr.bf16.gmra.mrb[0].mxu0 %v988
      %v1075 = vpop.f32.mrb[0].mxu0
      %v1076 = vadd.f32 0.0, %v1075
      %v1077 = vpop.f32.mrb[0].mxu0
      %v1078 = vadd.f32 0.0, %v1077
      %v1079 = vpop.f32.mrb[0].mxu0
      %v1080 = vpop.f32.mrb[0].mxu0
      %1081 = vdwg.mxu0
      %v1082 = vadd.f32 %v994, %v1035
      %v1083 = vadd.f32 %v995, %v1037
      %v1084 = vxor.u32 %v1082, 2147483648
      %v1085 = vxor.u32 %v1083, 2147483648
      %v1086 = vmul.f32 %v1084, 1.442695
      %v1087 = vpow.pop %v1086
      %v1088 = vmul.f32 %v1085, 1.442695
      %v1089 = vpow.pop %v1088
      %v1090 = vadd.f32 %v1087, 1.0
      %v1091 = vadd.f32 %v1089, 1.0
      %v1092 = vrcp.pop %v1090
      %v1093 = vmul.f32 1.0, %v1092
      %v1094 = vrcp.pop %v1091
      %v1095 = vmul.f32 1.0, %v1094
      %v1096 = vadd.f32 %v996, %v1076
      %v1097 = vadd.f32 %v997, %v1078
      %v1098 = vxor.u32 %v1096, 2147483648
      %v1099 = vxor.u32 %v1097, 2147483648
      %v1100 = vmul.f32 %v1098, 1.442695
      %v1101 = vpow.pop %v1100
      %v1102 = vmul.f32 %v1099, 1.442695
      %v1103 = vpow.pop %v1102
      %v1104 = vadd.f32 %v1101, 1.0
      %v1105 = vadd.f32 %v1103, 1.0
      %v1106 = vrcp.pop %v1104
      %v1107 = vmul.f32 1.0, %v1106
      %v1108 = vrcp.pop %v1105
      %v1109 = vmul.f32 1.0, %v1108
      %1110 = vmatprep.subr.bf16.mxu0 %v683
      %1111 = vmatpush1.bf16.msra.mxu0 %v682
      %1112 = vmatprep.subr.bf16.mxu0 %v685
      %1113 = vmatpush1.bf16.msra.mxu0 %v684
      %1114 = vmatprep.subr.bf16.mxu0 %v687
      %1115 = vmatpush1.bf16.msra.mxu0 %v686
      %1116 = vmatprep.subr.bf16.mxu0 %v689
      %1117 = vmatpush1.bf16.msra.mxu0 %v688
      %1118 = vmatprep.subr.bf16.mxu0 %v691
      %1119 = vmatpush1.bf16.msra.mxu0 %v690
      %1120 = vmatprep.subr.bf16.mxu0 %v693
      %1121 = vmatpush1.bf16.msra.mxu0 %v692
      %1122 = vmatprep.subr.bf16.mxu0 %v695
      %1123 = vmatpush1.bf16.msra.mxu0 %v694
      %1124 = vmatprep.subr.bf16.mxu0 %v697
      %1125 = vmatpush1.bf16.msra.mxu0 %v696
      %1126 = vmatprep.subr.bf16.mxu0 %v699
      %1127 = vmatpush1.bf16.msra.mxu0 %v698
      %1128 = vmatprep.subr.bf16.mxu0 %v701
      %1129 = vmatpush1.bf16.msra.mxu0 %v700
      %1130 = vmatprep.subr.bf16.mxu0 %v703
      %1131 = vmatpush1.bf16.msra.mxu0 %v702
      %1132 = vmatprep.subr.bf16.mxu0 %v705
      %1133 = vmatpush1.bf16.msra.mxu0 %v704
      %1134 = vmatprep.subr.bf16.mxu0 %v707
      %1135 = vmatpush1.bf16.msra.mxu0 %v706
      %1136 = vmatprep.subr.bf16.mxu0 %v709
      %1137 = vmatpush1.bf16.msra.mxu0 %v708
      %1138 = vmatprep.subr.bf16.mxu0 %v711
      %1139 = vmatpush1.bf16.msra.mxu0 %v710
      %1140 = vmatprep.subr.bf16.mxu0 %v713
      %1141 = vmatpush1.bf16.msra.mxu0 %v712
      %1142 = vmatprep.mubr.bf16.mxu0 %v989
      %1143 = vmatmul.mubr.bf16.gmra.mrb[0].mxu0 %v988
      %v1144 = vpop.f32.mrb[0].mxu0
      %v1145 = vadd.f32 %v125, %v1144
      %v1146 = vpop.f32.mrb[0].mxu0
      %v1147 = vadd.f32 %v129, %v1146
      %v1148 = vpop.f32.mrb[0].mxu0
      %v1149 = vpop.f32.mrb[0].mxu0
      %1150 = vdwg.mxu0
      %v1151 = vmul.f32 %v1093, %v1145
      %v1152 = vmul.f32 %v1095, %v1147
      %v1153 = vadd.f32 %v998, %v1151
      %v1154 = vadd.f32 %v999, %v1152
      %v1155 = vtanh.pop %v1153
      %v1156 = vtanh.pop %v1154
      %v1157 = vsub.f32 1.0, %v1107
      %v1158 = vsub.f32 1.0, %v1109
      %v1159 = vmul.f32 %v1157, %v1155
      %v1160 = vmul.f32 %v1158, %v1156
      %v1161 = vmul.f32 %v1107, %v981
      %v1162 = vmul.f32 %v1109, %v982
      %v1163 = vadd.f32 %v1159, %v1161
      %v1164 = vadd.f32 %v1160, %v1162
      %s1165 = smul.u32 %s990, 2
      %s1166 = smul.addr %s1165, 8
      %s1167 = scalar_lea.vmem [#allocation3], %s1166
      %1168 = vst [vmem:[%s1167] sm:$0xff] %v1163
      %1169 = vst [vmem:[%s1167 + $0x8] sm:$0xff] %v1164
      %v1170 = vpack.c.bf16 %v1163, %v1163
      %v1171 = vpack.c.bf16 %v1164, %v1164
      %s1172 = sadd.s32 %s146, 3
      %s1173 = smul.u32 %s1172, 6
      %s1174 = smul.addr %s1173, 8
      %s1175 = scalar_lea.vmem %s0, %s1174
      %v1176 = vld [vmem:[%s1175] sm:$0xff]
      %v1177 = vld [vmem:[%s1175 + $0x8] sm:$0xff]
      %v1178 = vld [vmem:[%s1175 + $0x10] sm:$0xff]
      %v1179 = vld [vmem:[%s1175 + $0x18] sm:$0xff]
      %v1180 = vld [vmem:[%s1175 + $0x20] sm:$0xff]
      %v1181 = vld [vmem:[%s1175 + $0x28] sm:$0xff]
      %1182 = vmatprep.subr.bf16.mxu0 %v349
      %1183 = vmatpush1.bf16.msra.mxu0 %v348
      %1184 = vmatprep.subr.bf16.mxu0 %v353
      %1185 = vmatpush1.bf16.msra.mxu0 %v352
      %1186 = vmatprep.subr.bf16.mxu0 %v357
      %1187 = vmatpush1.bf16.msra.mxu0 %v356
      %1188 = vmatprep.subr.bf16.mxu0 %v361
      %1189 = vmatpush1.bf16.msra.mxu0 %v360
      %1190 = vmatprep.subr.bf16.mxu0 %v365
      %1191 = vmatpush1.bf16.msra.mxu0 %v364
      %1192 = vmatprep.subr.bf16.mxu0 %v369
      %1193 = vmatpush1.bf16.msra.mxu0 %v368
      %1194 = vmatprep.subr.bf16.mxu0 %v373
      %1195 = vmatpush1.bf16.msra.mxu0 %v372
      %1196 = vmatprep.subr.bf16.mxu0 %v377
      %1197 = vmatpush1.bf16.msra.mxu0 %v376
      %1198 = vmatprep.subr.bf16.mxu0 %v381
      %1199 = vmatpush1.bf16.msra.mxu0 %v380
      %1200 = vmatprep.subr.bf16.mxu0 %v385
      %1201 = vmatpush1.bf16.msra.mxu0 %v384
      %1202 = vmatprep.subr.bf16.mxu0 %v389
      %1203 = vmatpush1.bf16.msra.mxu0 %v388
      %1204 = vmatprep.subr.bf16.mxu0 %v393
      %1205 = vmatpush1.bf16.msra.mxu0 %v392
      %1206 = vmatprep.subr.bf16.mxu0 %v397
      %1207 = vmatpush1.bf16.msra.mxu0 %v396
      %1208 = vmatprep.subr.bf16.mxu0 %v401
      %1209 = vmatpush1.bf16.msra.mxu0 %v400
      %1210 = vmatprep.subr.bf16.mxu0 %v405
      %1211 = vmatpush1.bf16.msra.mxu0 %v404
      %1212 = vmatprep.subr.bf16.mxu0 %v409
      %1213 = vmatpush1.bf16.msra.mxu0 %v408
      %1214 = vmatprep.mubr.bf16.mxu0 %v1171
      %1215 = vmatmul.mubr.bf16.gmra.mrb[0].mxu0 %v1170
      %v1216 = vpop.f32.mrb[0].mxu0
      %v1217 = vadd.f32 0.0, %v1216
      %v1218 = vpop.f32.mrb[0].mxu0
      %v1219 = vadd.f32 0.0, %v1218
      %v1220 = vpop.f32.mrb[0].mxu0
      %v1221 = vpop.f32.mrb[0].mxu0
      %1222 = vdwg.mxu0
      %1223 = vmatprep.subr.bf16.mxu0 %v351
      %1224 = vmatpush1.bf16.msra.mxu0 %v350
      %1225 = vmatprep.subr.bf16.mxu0 %v355
      %1226 = vmatpush1.bf16.msra.mxu0 %v354
      %1227 = vmatprep.subr.bf16.mxu0 %v359
      %1228 = vmatpush1.bf16.msra.mxu0 %v358
      %1229 = vmatprep.subr.bf16.mxu0 %v363
      %1230 = vmatpush1.bf16.msra.mxu0 %v362
      %1231 = vmatprep.subr.bf16.mxu0 %v367
      %1232 = vmatpush1.bf16.msra.mxu0 %v366
      %1233 = vmatprep.subr.bf16.mxu0 %v371
      %1234 = vmatpush1.bf16.msra.mxu0 %v370
      %1235 = vmatprep.subr.bf16.mxu0 %v375
      %1236 = vmatpush1.bf16.msra.mxu0 %v374
      %1237 = vmatprep.subr.bf16.mxu0 %v379
      %1238 = vmatpush1.bf16.msra.mxu0 %v378
      %1239 = vmatprep.subr.bf16.mxu0 %v383
      %1240 = vmatpush1.bf16.msra.mxu0 %v382
      %1241 = vmatprep.subr.bf16.mxu0 %v387
      %1242 = vmatpush1.bf16.msra.mxu0 %v386
      %1243 = vmatprep.subr.bf16.mxu0 %v391
      %1244 = vmatpush1.bf16.msra.mxu0 %v390
      %1245 = vmatprep.subr.bf16.mxu0 %v395
      %1246 = vmatpush1.bf16.msra.mxu0 %v394
      %1247 = vmatprep.subr.bf16.mxu0 %v399
      %1248 = vmatpush1.bf16.msra.mxu0 %v398
      %1249 = vmatprep.subr.bf16.mxu0 %v403
      %1250 = vmatpush1.bf16.msra.mxu0 %v402
      %1251 = vmatprep.subr.bf16.mxu0 %v407
      %1252 = vmatpush1.bf16.msra.mxu0 %v406
      %1253 = vmatprep.subr.bf16.mxu0 %v411
      %1254 = vmatpush1.bf16.msra.mxu0 %v410
      %1255 = vmatprep.mubr.bf16.mxu0 %v1171
      %1256 = vmatmul.mubr.bf16.gmra.mrb[0].mxu0 %v1170
      %v1257 = vpop.f32.mrb[0].mxu0
      %v1258 = vadd.f32 0.0, %v1257
      %v1259 = vpop.f32.mrb[0].mxu0
      %v1260 = vadd.f32 0.0, %v1259
      %v1261 = vpop.f32.mrb[0].mxu0
      %v1262 = vpop.f32.mrb[0].mxu0
      %1263 = vdwg.mxu0
      %v1264 = vadd.f32 %v1176, %v1217
      %v1265 = vadd.f32 %v1177, %v1219
      %v1266 = vxor.u32 %v1264, 2147483648
      %v1267 = vxor.u32 %v1265, 2147483648
      %v1268 = vmul.f32 %v1266, 1.442695
      %v1269 = vpow.pop %v1268
      %v1270 = vmul.f32 %v1267, 1.442695
      %v1271 = vpow.pop %v1270
      %v1272 = vadd.f32 %v1269, 1.0
      %v1273 = vadd.f32 %v1271, 1.0
      %v1274 = vrcp.pop %v1272
      %v1275 = vmul.f32 1.0, %v1274
      %v1276 = vrcp.pop %v1273
      %v1277 = vmul.f32 1.0, %v1276
      %v1278 = vadd.f32 %v1178, %v1258
      %v1279 = vadd.f32 %v1179, %v1260
      %v1280 = vxor.u32 %v1278, 2147483648
      %v1281 = vxor.u32 %v1279, 2147483648
      %v1282 = vmul.f32 %v1280, 1.442695
      %v1283 = vpow.pop %v1282
      %v1284 = vmul.f32 %v1281, 1.442695
      %v1285 = vpow.pop %v1284
      %v1286 = vadd.f32 %v1283, 1.0
      %v1287 = vadd.f32 %v1285, 1.0
      %v1288 = vrcp.pop %v1286
      %v1289 = vmul.f32 1.0, %v1288
      %v1290 = vrcp.pop %v1287
      %v1291 = vmul.f32 1.0, %v1290
      %1292 = vmatprep.subr.bf16.mxu0 %v683
      %1293 = vmatpush1.bf16.msra.mxu0 %v682
      %1294 = vmatprep.subr.bf16.mxu0 %v685
      %1295 = vmatpush1.bf16.msra.mxu0 %v684
      %1296 = vmatprep.subr.bf16.mxu0 %v687
      %1297 = vmatpush1.bf16.msra.mxu0 %v686
      %1298 = vmatprep.subr.bf16.mxu0 %v689
      %1299 = vmatpush1.bf16.msra.mxu0 %v688
      %1300 = vmatprep.subr.bf16.mxu0 %v691
      %1301 = vmatpush1.bf16.msra.mxu0 %v690
      %1302 = vmatprep.subr.bf16.mxu0 %v693
      %1303 = vmatpush1.bf16.msra.mxu0 %v692
      %1304 = vmatprep.subr.bf16.mxu0 %v695
      %1305 = vmatpush1.bf16.msra.mxu0 %v694
      %1306 = vmatprep.subr.bf16.mxu0 %v697
      %1307 = vmatpush1.bf16.msra.mxu0 %v696
      %1308 = vmatprep.subr.bf16.mxu0 %v699
      %1309 = vmatpush1.bf16.msra.mxu0 %v698
      %1310 = vmatprep.subr.bf16.mxu0 %v701
      %1311 = vmatpush1.bf16.msra.mxu0 %v700
      %1312 = vmatprep.subr.bf16.mxu0 %v703
      %1313 = vmatpush1.bf16.msra.mxu0 %v702
      %1314 = vmatprep.subr.bf16.mxu0 %v705
      %1315 = vmatpush1.bf16.msra.mxu0 %v704
      %1316 = vmatprep.subr.bf16.mxu0 %v707
      %1317 = vmatpush1.bf16.msra.mxu0 %v706
      %1318 = vmatprep.subr.bf16.mxu0 %v709
      %1319 = vmatpush1.bf16.msra.mxu0 %v708
      %1320 = vmatprep.subr.bf16.mxu0 %v711
      %1321 = vmatpush1.bf16.msra.mxu0 %v710
      %1322 = vmatprep.subr.bf16.mxu0 %v713
      %1323 = vmatpush1.bf16.msra.mxu0 %v712
      %1324 = vmatprep.mubr.bf16.mxu0 %v1171
      %1325 = vmatmul.mubr.bf16.gmra.mrb[0].mxu0 %v1170
      %v1326 = vpop.f32.mrb[0].mxu0
      %v1327 = vadd.f32 %v125, %v1326
      %v1328 = vpop.f32.mrb[0].mxu0
      %v1329 = vadd.f32 %v129, %v1328
      %v1330 = vpop.f32.mrb[0].mxu0
      %v1331 = vpop.f32.mrb[0].mxu0
      %1332 = vdwg.mxu0
      %v1333 = vmul.f32 %v1275, %v1327
      %v1334 = vmul.f32 %v1277, %v1329
      %v1335 = vadd.f32 %v1180, %v1333
      %v1336 = vadd.f32 %v1181, %v1334
      %v1337 = vtanh.pop %v1335
      %v1338 = vtanh.pop %v1336
      %v1339 = vsub.f32 1.0, %v1289
      %v1340 = vsub.f32 1.0, %v1291
      %v1341 = vmul.f32 %v1339, %v1337
      %v1342 = vmul.f32 %v1340, %v1338
      %v1343 = vmul.f32 %v1289, %v1163
      %v1344 = vmul.f32 %v1291, %v1164
      %v1345 = vadd.f32 %v1341, %v1343
      %v1346 = vadd.f32 %v1342, %v1344
      %s1347 = smul.u32 %s1172, 2
      %s1348 = smul.addr %s1347, 8
      %s1349 = scalar_lea.vmem [#allocation3], %s1348
      %1350 = vst [vmem:[%s1349] sm:$0xff] %v1345
      %1351 = vst [vmem:[%s1349 + $0x8] sm:$0xff] %v1346
      %v1352 = vpack.c.bf16 %v1345, %v1345
      %v1353 = vpack.c.bf16 %v1346, %v1346
      %s1354 = sadd.s32 %s146, 4
      %s1355 = smul.u32 %s1354, 6
      %s1356 = smul.addr %s1355, 8
      %s1357 = scalar_lea.vmem %s0, %s1356
      %v1358 = vld [vmem:[%s1357] sm:$0xff]
      %v1359 = vld [vmem:[%s1357 + $0x8] sm:$0xff]
      %v1360 = vld [vmem:[%s1357 + $0x10] sm:$0xff]
      %v1361 = vld [vmem:[%s1357 + $0x18] sm:$0xff]
      %v1362 = vld [vmem:[%s1357 + $0x20] sm:$0xff]
      %v1363 = vld [vmem:[%s1357 + $0x28] sm:$0xff]
      %1364 = vmatprep.subr.bf16.mxu0 %v349
      %1365 = vmatpush1.bf16.msra.mxu0 %v348
      %1366 = vmatprep.subr.bf16.mxu0 %v353
      %1367 = vmatpush1.bf16.msra.mxu0 %v352
      %1368 = vmatprep.subr.bf16.mxu0 %v357
      %1369 = vmatpush1.bf16.msra.mxu0 %v356
      %1370 = vmatprep.subr.bf16.mxu0 %v361
      %1371 = vmatpush1.bf16.msra.mxu0 %v360
      %1372 = vmatprep.subr.bf16.mxu0 %v365
      %1373 = vmatpush1.bf16.msra.mxu0 %v364
      %1374 = vmatprep.subr.bf16.mxu0 %v369
      %1375 = vmatpush1.bf16.msra.mxu0 %v368
      %1376 = vmatprep.subr.bf16.mxu0 %v373
      %1377 = vmatpush1.bf16.msra.mxu0 %v372
      %1378 = vmatprep.subr.bf16.mxu0 %v377
      %1379 = vmatpush1.bf16.msra.mxu0 %v376
      %1380 = vmatprep.subr.bf16.mxu0 %v381
      %1381 = vmatpush1.bf16.msra.mxu0 %v380
      %1382 = vmatprep.subr.bf16.mxu0 %v385
      %1383 = vmatpush1.bf16.msra.mxu0 %v384
      %1384 = vmatprep.subr.bf16.mxu0 %v389
      %1385 = vmatpush1.bf16.msra.mxu0 %v388
      %1386 = vmatprep.subr.bf16.mxu0 %v393
      %1387 = vmatpush1.bf16.msra.mxu0 %v392
      %1388 = vmatprep.subr.bf16.mxu0 %v397
      %1389 = vmatpush1.bf16.msra.mxu0 %v396
      %1390 = vmatprep.subr.bf16.mxu0 %v401
      %1391 = vmatpush1.bf16.msra.mxu0 %v400
      %1392 = vmatprep.subr.bf16.mxu0 %v405
      %1393 = vmatpush1.bf16.msra.mxu0 %v404
      %1394 = vmatprep.subr.bf16.mxu0 %v409
      %1395 = vmatpush1.bf16.msra.mxu0 %v408
      %1396 = vmatprep.mubr.bf16.mxu0 %v1353
      %1397 = vmatmul.mubr.bf16.gmra.mrb[0].mxu0 %v1352
      %v1398 = vpop.f32.mrb[0].mxu0
      %v1399 = vadd.f32 0.0, %v1398
      %v1400 = vpop.f32.mrb[0].mxu0
      %v1401 = vadd.f32 0.0, %v1400
      %v1402 = vpop.f32.mrb[0].mxu0
      %v1403 = vpop.f32.mrb[0].mxu0
      %1404 = vdwg.mxu0
      %1405 = vmatprep.subr.bf16.mxu0 %v351
      %1406 = vmatpush1.bf16.msra.mxu0 %v350
      %1407 = vmatprep.subr.bf16.mxu0 %v355
      %1408 = vmatpush1.bf16.msra.mxu0 %v354
      %1409 = vmatprep.subr.bf16.mxu0 %v359
      %1410 = vmatpush1.bf16.msra.mxu0 %v358
      %1411 = vmatprep.subr.bf16.mxu0 %v363
      %1412 = vmatpush1.bf16.msra.mxu0 %v362
      %1413 = vmatprep.subr.bf16.mxu0 %v367
      %1414 = vmatpush1.bf16.msra.mxu0 %v366
      %1415 = vmatprep.subr.bf16.mxu0 %v371
      %1416 = vmatpush1.bf16.msra.mxu0 %v370
      %1417 = vmatprep.subr.bf16.mxu0 %v375
      %1418 = vmatpush1.bf16.msra.mxu0 %v374
      %1419 = vmatprep.subr.bf16.mxu0 %v379
      %1420 = vmatpush1.bf16.msra.mxu0 %v378
      %1421 = vmatprep.subr.bf16.mxu0 %v383
      %1422 = vmatpush1.bf16.msra.mxu0 %v382
      %1423 = vmatprep.subr.bf16.mxu0 %v387
      %1424 = vmatpush1.bf16.msra.mxu0 %v386
      %1425 = vmatprep.subr.bf16.mxu0 %v391
      %1426 = vmatpush1.bf16.msra.mxu0 %v390
      %1427 = vmatprep.subr.bf16.mxu0 %v395
      %1428 = vmatpush1.bf16.msra.mxu0 %v394
      %1429 = vmatprep.subr.bf16.mxu0 %v399
      %1430 = vmatpush1.bf16.msra.mxu0 %v398
      %1431 = vmatprep.subr.bf16.mxu0 %v403
      %1432 = vmatpush1.bf16.msra.mxu0 %v402
      %1433 = vmatprep.subr.bf16.mxu0 %v407
      %1434 = vmatpush1.bf16.msra.mxu0 %v406
      %1435 = vmatprep.subr.bf16.mxu0 %v411
      %1436 = vmatpush1.bf16.msra.mxu0 %v410
      %1437 = vmatprep.mubr.bf16.mxu0 %v1353
      %1438 = vmatmul.mubr.bf16.gmra.mrb[0].mxu0 %v1352
      %v1439 = vpop.f32.mrb[0].mxu0
      %v1440 = vadd.f32 0.0, %v1439
      %v1441 = vpop.f32.mrb[0].mxu0
      %v1442 = vadd.f32 0.0, %v1441
      %v1443 = vpop.f32.mrb[0].mxu0
      %v1444 = vpop.f32.mrb[0].mxu0
      %1445 = vdwg.mxu0
      %v1446 = vadd.f32 %v1358, %v1399
      %v1447 = vadd.f32 %v1359, %v1401
      %v1448 = vxor.u32 %v1446, 2147483648
      %v1449 = vxor.u32 %v1447, 2147483648
      %v1450 = vmul.f32 %v1448, 1.442695
      %v1451 = vpow.pop %v1450
      %v1452 = vmul.f32 %v1449, 1.442695
      %v1453 = vpow.pop %v1452
      %v1454 = vadd.f32 %v1451, 1.0
      %v1455 = vadd.f32 %v1453, 1.0
      %v1456 = vrcp.pop %v1454
      %v1457 = vmul.f32 1.0, %v1456
      %v1458 = vrcp.pop %v1455
      %v1459 = vmul.f32 1.0, %v1458
      %v1460 = vadd.f32 %v1360, %v1440
      %v1461 = vadd.f32 %v1361, %v1442
      %v1462 = vxor.u32 %v1460, 2147483648
      %v1463 = vxor.u32 %v1461, 2147483648
      %v1464 = vmul.f32 %v1462, 1.442695
      %v1465 = vpow.pop %v1464
      %v1466 = vmul.f32 %v1463, 1.442695
      %v1467 = vpow.pop %v1466
      %v1468 = vadd.f32 %v1465, 1.0
      %v1469 = vadd.f32 %v1467, 1.0
      %v1470 = vrcp.pop %v1468
      %v1471 = vmul.f32 1.0, %v1470
      %v1472 = vrcp.pop %v1469
      %v1473 = vmul.f32 1.0, %v1472
      %1474 = vmatprep.subr.bf16.mxu0 %v683
      %1475 = vmatpush1.bf16.msra.mxu0 %v682
      %1476 = vmatprep.subr.bf16.mxu0 %v685
      %1477 = vmatpush1.bf16.msra.mxu0 %v684
      %1478 = vmatprep.subr.bf16.mxu0 %v687
      %1479 = vmatpush1.bf16.msra.mxu0 %v686
      %1480 = vmatprep.subr.bf16.mxu0 %v689
      %1481 = vmatpush1.bf16.msra.mxu0 %v688
      %1482 = vmatprep.subr.bf16.mxu0 %v691
      %1483 = vmatpush1.bf16.msra.mxu0 %v690
      %1484 = vmatprep.subr.bf16.mxu0 %v693
      %1485 = vmatpush1.bf16.msra.mxu0 %v692
      %1486 = vmatprep.subr.bf16.mxu0 %v695
      %1487 = vmatpush1.bf16.msra.mxu0 %v694
      %1488 = vmatprep.subr.bf16.mxu0 %v697
      %1489 = vmatpush1.bf16.msra.mxu0 %v696
      %1490 = vmatprep.subr.bf16.mxu0 %v699
      %1491 = vmatpush1.bf16.msra.mxu0 %v698
      %1492 = vmatprep.subr.bf16.mxu0 %v701
      %1493 = vmatpush1.bf16.msra.mxu0 %v700
      %1494 = vmatprep.subr.bf16.mxu0 %v703
      %1495 = vmatpush1.bf16.msra.mxu0 %v702
      %1496 = vmatprep.subr.bf16.mxu0 %v705
      %1497 = vmatpush1.bf16.msra.mxu0 %v704
      %1498 = vmatprep.subr.bf16.mxu0 %v707
      %1499 = vmatpush1.bf16.msra.mxu0 %v706
      %1500 = vmatprep.subr.bf16.mxu0 %v709
      %1501 = vmatpush1.bf16.msra.mxu0 %v708
      %1502 = vmatprep.subr.bf16.mxu0 %v711
      %1503 = vmatpush1.bf16.msra.mxu0 %v710
      %1504 = vmatprep.subr.bf16.mxu0 %v713
      %1505 = vmatpush1.bf16.msra.mxu0 %v712
      %1506 = vmatprep.mubr.bf16.mxu0 %v1353
      %1507 = vmatmul.mubr.bf16.gmra.mrb[0].mxu0 %v1352
      %v1508 = vpop.f32.mrb[0].mxu0
      %v1509 = vadd.f32 %v125, %v1508
      %v1510 = vpop.f32.mrb[0].mxu0
      %v1511 = vadd.f32 %v129, %v1510
      %v1512 = vpop.f32.mrb[0].mxu0
      %v1513 = vpop.f32.mrb[0].mxu0
      %1514 = vdwg.mxu0
      %v1515 = vmul.f32 %v1457, %v1509
      %v1516 = vmul.f32 %v1459, %v1511
      %v1517 = vadd.f32 %v1362, %v1515
      %v1518 = vadd.f32 %v1363, %v1516
      %v1519 = vtanh.pop %v1517
      %v1520 = vtanh.pop %v1518
      %v1521 = vsub.f32 1.0, %v1471
      %v1522 = vsub.f32 1.0, %v1473
      %v1523 = vmul.f32 %v1521, %v1519
      %v1524 = vmul.f32 %v1522, %v1520
      %v1525 = vmul.f32 %v1471, %v1345
      %v1526 = vmul.f32 %v1473, %v1346
      %v1527 = vadd.f32 %v1523, %v1525
      %v1528 = vadd.f32 %v1524, %v1526
      %s1529 = smul.u32 %s1354, 2
      %s1530 = smul.addr %s1529, 8
      %s1531 = scalar_lea.vmem [#allocation3], %s1530
      %1532 = vst [vmem:[%s1531] sm:$0xff] %v1527
      %1533 = vst [vmem:[%s1531 + $0x8] sm:$0xff] %v1528
      %v1534 = vpack.c.bf16 %v1527, %v1527
      %v1535 = vpack.c.bf16 %v1528, %v1528
      %s1536 = sadd.s32 %s146, 5
      %s1537 = smul.u32 %s1536, 6
      %s1538 = smul.addr %s1537, 8
      %s1539 = scalar_lea.vmem %s0, %s1538
      %v1540 = vld [vmem:[%s1539] sm:$0xff]
      %v1541 = vld [vmem:[%s1539 + $0x8] sm:$0xff]
      %v1542 = vld [vmem:[%s1539 + $0x10] sm:$0xff]
      %v1543 = vld [vmem:[%s1539 + $0x18] sm:$0xff]
      %v1544 = vld [vmem:[%s1539 + $0x20] sm:$0xff]
      %v1545 = vld [vmem:[%s1539 + $0x28] sm:$0xff]
      %1546 = vmatprep.subr.bf16.mxu0 %v349
      %1547 = vmatpush1.bf16.msra.mxu0 %v348
      %1548 = vmatprep.subr.bf16.mxu0 %v353
      %1549 = vmatpush1.bf16.msra.mxu0 %v352
      %1550 = vmatprep.subr.bf16.mxu0 %v357
      %1551 = vmatpush1.bf16.msra.mxu0 %v356
      %1552 = vmatprep.subr.bf16.mxu0 %v361
      %1553 = vmatpush1.bf16.msra.mxu0 %v360
      %1554 = vmatprep.subr.bf16.mxu0 %v365
      %1555 = vmatpush1.bf16.msra.mxu0 %v364
      %1556 = vmatprep.subr.bf16.mxu0 %v369
      %1557 = vmatpush1.bf16.msra.mxu0 %v368
      %1558 = vmatprep.subr.bf16.mxu0 %v373
      %1559 = vmatpush1.bf16.msra.mxu0 %v372
      %1560 = vmatprep.subr.bf16.mxu0 %v377
      %1561 = vmatpush1.bf16.msra.mxu0 %v376
      %1562 = vmatprep.subr.bf16.mxu0 %v381
      %1563 = vmatpush1.bf16.msra.mxu0 %v380
      %1564 = vmatprep.subr.bf16.mxu0 %v385
      %1565 = vmatpush1.bf16.msra.mxu0 %v384
      %1566 = vmatprep.subr.bf16.mxu0 %v389
      %1567 = vmatpush1.bf16.msra.mxu0 %v388
      %1568 = vmatprep.subr.bf16.mxu0 %v393
      %1569 = vmatpush1.bf16.msra.mxu0 %v392
      %1570 = vmatprep.subr.bf16.mxu0 %v397
      %1571 = vmatpush1.bf16.msra.mxu0 %v396
      %1572 = vmatprep.subr.bf16.mxu0 %v401
      %1573 = vmatpush1.bf16.msra.mxu0 %v400
      %1574 = vmatprep.subr.bf16.mxu0 %v405
      %1575 = vmatpush1.bf16.msra.mxu0 %v404
      %1576 = vmatprep.subr.bf16.mxu0 %v409
      %1577 = vmatpush1.bf16.msra.mxu0 %v408
      %1578 = vmatprep.mubr.bf16.mxu0 %v1535
      %1579 = vmatmul.mubr.bf16.gmra.mrb[0].mxu0 %v1534
      %v1580 = vpop.f32.mrb[0].mxu0
      %v1581 = vadd.f32 0.0, %v1580
      %v1582 = vpop.f32.mrb[0].mxu0
      %v1583 = vadd.f32 0.0, %v1582
      %v1584 = vpop.f32.mrb[0].mxu0
      %v1585 = vpop.f32.mrb[0].mxu0
      %1586 = vdwg.mxu0
      %1587 = vmatprep.subr.bf16.mxu0 %v351
      %1588 = vmatpush1.bf16.msra.mxu0 %v350
      %1589 = vmatprep.subr.bf16.mxu0 %v355
      %1590 = vmatpush1.bf16.msra.mxu0 %v354
      %1591 = vmatprep.subr.bf16.mxu0 %v359
      %1592 = vmatpush1.bf16.msra.mxu0 %v358
      %1593 = vmatprep.subr.bf16.mxu0 %v363
      %1594 = vmatpush1.bf16.msra.mxu0 %v362
      %1595 = vmatprep.subr.bf16.mxu0 %v367
      %1596 = vmatpush1.bf16.msra.mxu0 %v366
      %1597 = vmatprep.subr.bf16.mxu0 %v371
      %1598 = vmatpush1.bf16.msra.mxu0 %v370
      %1599 = vmatprep.subr.bf16.mxu0 %v375
      %1600 = vmatpush1.bf16.msra.mxu0 %v374
      %1601 = vmatprep.subr.bf16.mxu0 %v379
      %1602 = vmatpush1.bf16.msra.mxu0 %v378
      %1603 = vmatprep.subr.bf16.mxu0 %v383
      %1604 = vmatpush1.bf16.msra.mxu0 %v382
      %1605 = vmatprep.subr.bf16.mxu0 %v387
      %1606 = vmatpush1.bf16.msra.mxu0 %v386
      %1607 = vmatprep.subr.bf16.mxu0 %v391
      %1608 = vmatpush1.bf16.msra.mxu0 %v390
      %1609 = vmatprep.subr.bf16.mxu0 %v395
      %1610 = vmatpush1.bf16.msra.mxu0 %v394
      %1611 = vmatprep.subr.bf16.mxu0 %v399
      %1612 = vmatpush1.bf16.msra.mxu0 %v398
      %1613 = vmatprep.subr.bf16.mxu0 %v403
      %1614 = vmatpush1.bf16.msra.mxu0 %v402
      %1615 = vmatprep.subr.bf16.mxu0 %v407
      %1616 = vmatpush1.bf16.msra.mxu0 %v406
      %1617 = vmatprep.subr.bf16.mxu0 %v411
      %1618 = vmatpush1.bf16.msra.mxu0 %v410
      %1619 = vmatprep.mubr.bf16.mxu0 %v1535
      %1620 = vmatmul.mubr.bf16.gmra.mrb[0].mxu0 %v1534
      %v1621 = vpop.f32.mrb[0].mxu0
      %v1622 = vadd.f32 0.0, %v1621
      %v1623 = vpop.f32.mrb[0].mxu0
      %v1624 = vadd.f32 0.0, %v1623
      %v1625 = vpop.f32.mrb[0].mxu0
      %v1626 = vpop.f32.mrb[0].mxu0
      %1627 = vdwg.mxu0
      %v1628 = vadd.f32 %v1540, %v1581
      %v1629 = vadd.f32 %v1541, %v1583
      %v1630 = vxor.u32 %v1628, 2147483648
      %v1631 = vxor.u32 %v1629, 2147483648
      %v1632 = vmul.f32 %v1630, 1.442695
      %v1633 = vpow.pop %v1632
      %v1634 = vmul.f32 %v1631, 1.442695
      %v1635 = vpow.pop %v1634
      %v1636 = vadd.f32 %v1633, 1.0
      %v1637 = vadd.f32 %v1635, 1.0
      %v1638 = vrcp.pop %v1636
      %v1639 = vmul.f32 1.0, %v1638
      %v1640 = vrcp.pop %v1637
      %v1641 = vmul.f32 1.0, %v1640
      %v1642 = vadd.f32 %v1542, %v1622
      %v1643 = vadd.f32 %v1543, %v1624
      %v1644 = vxor.u32 %v1642, 2147483648
      %v1645 = vxor.u32 %v1643, 2147483648
      %v1646 = vmul.f32 %v1644, 1.442695
      %v1647 = vpow.pop %v1646
      %v1648 = vmul.f32 %v1645, 1.442695
      %v1649 = vpow.pop %v1648
      %v1650 = vadd.f32 %v1647, 1.0
      %v1651 = vadd.f32 %v1649, 1.0
      %v1652 = vrcp.pop %v1650
      %v1653 = vmul.f32 1.0, %v1652
      %v1654 = vrcp.pop %v1651
      %v1655 = vmul.f32 1.0, %v1654
      %1656 = vmatprep.subr.bf16.mxu0 %v683
      %1657 = vmatpush1.bf16.msra.mxu0 %v682
      %1658 = vmatprep.subr.bf16.mxu0 %v685
      %1659 = vmatpush1.bf16.msra.mxu0 %v684
      %1660 = vmatprep.subr.bf16.mxu0 %v687
      %1661 = vmatpush1.bf16.msra.mxu0 %v686
      %1662 = vmatprep.subr.bf16.mxu0 %v689
      %1663 = vmatpush1.bf16.msra.mxu0 %v688
      %1664 = vmatprep.subr.bf16.mxu0 %v691
      %1665 = vmatpush1.bf16.msra.mxu0 %v690
      %1666 = vmatprep.subr.bf16.mxu0 %v693
      %1667 = vmatpush1.bf16.msra.mxu0 %v692
      %1668 = vmatprep.subr.bf16.mxu0 %v695
      %1669 = vmatpush1.bf16.msra.mxu0 %v694
      %1670 = vmatprep.subr.bf16.mxu0 %v697
      %1671 = vmatpush1.bf16.msra.mxu0 %v696
      %1672 = vmatprep.subr.bf16.mxu0 %v699
      %1673 = vmatpush1.bf16.msra.mxu0 %v698
      %1674 = vmatprep.subr.bf16.mxu0 %v701
      %1675 = vmatpush1.bf16.msra.mxu0 %v700
      %1676 = vmatprep.subr.bf16.mxu0 %v703
      %1677 = vmatpush1.bf16.msra.mxu0 %v702
      %1678 = vmatprep.subr.bf16.mxu0 %v705
      %1679 = vmatpush1.bf16.msra.mxu0 %v704
      %1680 = vmatprep.subr.bf16.mxu0 %v707
      %1681 = vmatpush1.bf16.msra.mxu0 %v706
      %1682 = vmatprep.subr.bf16.mxu0 %v709
      %1683 = vmatpush1.bf16.msra.mxu0 %v708
      %1684 = vmatprep.subr.bf16.mxu0 %v711
      %1685 = vmatpush1.bf16.msra.mxu0 %v710
      %1686 = vmatprep.subr.bf16.mxu0 %v713
      %1687 = vmatpush1.bf16.msra.mxu0 %v712
      %1688 = vmatprep.mubr.bf16.mxu0 %v1535
      %1689 = vmatmul.mubr.bf16.gmra.mrb[0].mxu0 %v1534
      %v1690 = vpop.f32.mrb[0].mxu0
      %v1691 = vadd.f32 %v125, %v1690
      %v1692 = vpop.f32.mrb[0].mxu0
      %v1693 = vadd.f32 %v129, %v1692
      %v1694 = vpop.f32.mrb[0].mxu0
      %v1695 = vpop.f32.mrb[0].mxu0
      %1696 = vdwg.mxu0
      %v1697 = vmul.f32 %v1639, %v1691
      %v1698 = vmul.f32 %v1641, %v1693
      %v1699 = vadd.f32 %v1544, %v1697
      %v1700 = vadd.f32 %v1545, %v1698
      %v1701 = vtanh.pop %v1699
      %v1702 = vtanh.pop %v1700
      %v1703 = vsub.f32 1.0, %v1653
      %v1704 = vsub.f32 1.0, %v1655
      %v1705 = vmul.f32 %v1703, %v1701
      %v1706 = vmul.f32 %v1704, %v1702
      %v1707 = vmul.f32 %v1653, %v1527
      %v1708 = vmul.f32 %v1655, %v1528
      %v1709 = vadd.f32 %v1705, %v1707
      %v1710 = vadd.f32 %v1706, %v1708
      %s1711 = smul.u32 %s1536, 2
      %s1712 = smul.addr %s1711, 8
      %s1713 = scalar_lea.vmem [#allocation3], %s1712
      %1714 = vst [vmem:[%s1713] sm:$0xff] %v1709
      %1715 = vst [vmem:[%s1713 + $0x8] sm:$0xff] %v1710
      %v1716 = vpack.c.bf16 %v1709, %v1709
      %v1717 = vpack.c.bf16 %v1710, %v1710
      %s1718 = sadd.s32 %s146, 6
      %s1719 = smul.u32 %s1718, 6
      %s1720 = smul.addr %s1719, 8
      %s1721 = scalar_lea.vmem %s0, %s1720
      %v1722 = vld [vmem:[%s1721] sm:$0xff]
      %v1723 = vld [vmem:[%s1721 + $0x8] sm:$0xff]
      %v1724 = vld [vmem:[%s1721 + $0x10] sm:$0xff]
      %v1725 = vld [vmem:[%s1721 + $0x18] sm:$0xff]
      %v1726 = vld [vmem:[%s1721 + $0x20] sm:$0xff]
      %v1727 = vld [vmem:[%s1721 + $0x28] sm:$0xff]
      %1728 = vmatprep.subr.bf16.mxu0 %v349
      %1729 = vmatpush1.bf16.msra.mxu0 %v348
      %1730 = vmatprep.subr.bf16.mxu0 %v353
      %1731 = vmatpush1.bf16.msra.mxu0 %v352
      %1732 = vmatprep.subr.bf16.mxu0 %v357
      %1733 = vmatpush1.bf16.msra.mxu0 %v356
      %1734 = vmatprep.subr.bf16.mxu0 %v361
      %1735 = vmatpush1.bf16.msra.mxu0 %v360
      %1736 = vmatprep.subr.bf16.mxu0 %v365
      %1737 = vmatpush1.bf16.msra.mxu0 %v364
      %1738 = vmatprep.subr.bf16.mxu0 %v369
      %1739 = vmatpush1.bf16.msra.mxu0 %v368
      %1740 = vmatprep.subr.bf16.mxu0 %v373
      %1741 = vmatpush1.bf16.msra.mxu0 %v372
      %1742 = vmatprep.subr.bf16.mxu0 %v377
      %1743 = vmatpush1.bf16.msra.mxu0 %v376
      %1744 = vmatprep.subr.bf16.mxu0 %v381
      %1745 = vmatpush1.bf16.msra.mxu0 %v380
      %1746 = vmatprep.subr.bf16.mxu0 %v385
      %1747 = vmatpush1.bf16.msra.mxu0 %v384
      %1748 = vmatprep.subr.bf16.mxu0 %v389
      %1749 = vmatpush1.bf16.msra.mxu0 %v388
      %1750 = vmatprep.subr.bf16.mxu0 %v393
      %1751 = vmatpush1.bf16.msra.mxu0 %v392
      %1752 = vmatprep.subr.bf16.mxu0 %v397
      %1753 = vmatpush1.bf16.msra.mxu0 %v396
      %1754 = vmatprep.subr.bf16.mxu0 %v401
      %1755 = vmatpush1.bf16.msra.mxu0 %v400
      %1756 = vmatprep.subr.bf16.mxu0 %v405
      %1757 = vmatpush1.bf16.msra.mxu0 %v404
      %1758 = vmatprep.subr.bf16.mxu0 %v409
      %1759 = vmatpush1.bf16.msra.mxu0 %v408
      %1760 = vmatprep.mubr.bf16.mxu0 %v1717
      %1761 = vmatmul.mubr.bf16.gmra.mrb[0].mxu0 %v1716
      %v1762 = vpop.f32.mrb[0].mxu0
      %v1763 = vadd.f32 0.0, %v1762
      %v1764 = vpop.f32.mrb[0].mxu0
      %v1765 = vadd.f32 0.0, %v1764
      %v1766 = vpop.f32.mrb[0].mxu0
      %v1767 = vpop.f32.mrb[0].mxu0
      %1768 = vdwg.mxu0
      %1769 = vmatprep.subr.bf16.mxu0 %v351
      %1770 = vmatpush1.bf16.msra.mxu0 %v350
      %1771 = vmatprep.subr.bf16.mxu0 %v355
      %1772 = vmatpush1.bf16.msra.mxu0 %v354
      %1773 = vmatprep.subr.bf16.mxu0 %v359
      %1774 = vmatpush1.bf16.msra.mxu0 %v358
      %1775 = vmatprep.subr.bf16.mxu0 %v363
      %1776 = vmatpush1.bf16.msra.mxu0 %v362
      %1777 = vmatprep.subr.bf16.mxu0 %v367
      %1778 = vmatpush1.bf16.msra.mxu0 %v366
      %1779 = vmatprep.subr.bf16.mxu0 %v371
      %1780 = vmatpush1.bf16.msra.mxu0 %v370
      %1781 = vmatprep.subr.bf16.mxu0 %v375
      %1782 = vmatpush1.bf16.msra.mxu0 %v374
      %1783 = vmatprep.subr.bf16.mxu0 %v379
      %1784 = vmatpush1.bf16.msra.mxu0 %v378
      %1785 = vmatprep.subr.bf16.mxu0 %v383
      %1786 = vmatpush1.bf16.msra.mxu0 %v382
      %1787 = vmatprep.subr.bf16.mxu0 %v387
      %1788 = vmatpush1.bf16.msra.mxu0 %v386
      %1789 = vmatprep.subr.bf16.mxu0 %v391
      %1790 = vmatpush1.bf16.msra.mxu0 %v390
      %1791 = vmatprep.subr.bf16.mxu0 %v395
      %1792 = vmatpush1.bf16.msra.mxu0 %v394
      %1793 = vmatprep.subr.bf16.mxu0 %v399
      %1794 = vmatpush1.bf16.msra.mxu0 %v398
      %1795 = vmatprep.subr.bf16.mxu0 %v403
      %1796 = vmatpush1.bf16.msra.mxu0 %v402
      %1797 = vmatprep.subr.bf16.mxu0 %v407
      %1798 = vmatpush1.bf16.msra.mxu0 %v406
      %1799 = vmatprep.subr.bf16.mxu0 %v411
      %1800 = vmatpush1.bf16.msra.mxu0 %v410
      %1801 = vmatprep.mubr.bf16.mxu0 %v1717
      %1802 = vmatmul.mubr.bf16.gmra.mrb[0].mxu0 %v1716
      %v1803 = vpop.f32.mrb[0].mxu0
      %v1804 = vadd.f32 0.0, %v1803
      %v1805 = vpop.f32.mrb[0].mxu0
      %v1806 = vadd.f32 0.0, %v1805
      %v1807 = vpop.f32.mrb[0].mxu0
      %v1808 = vpop.f32.mrb[0].mxu0
      %1809 = vdwg.mxu0
      %v1810 = vadd.f32 %v1722, %v1763
      %v1811 = vadd.f32 %v1723, %v1765
      %v1812 = vxor.u32 %v1810, 2147483648
      %v1813 = vxor.u32 %v1811, 2147483648
      %v1814 = vmul.f32 %v1812, 1.442695
      %v1815 = vpow.pop %v1814
      %v1816 = vmul.f32 %v1813, 1.442695
      %v1817 = vpow.pop %v1816
      %v1818 = vadd.f32 %v1815, 1.0
      %v1819 = vadd.f32 %v1817, 1.0
      %v1820 = vrcp.pop %v1818
      %v1821 = vmul.f32 1.0, %v1820
      %v1822 = vrcp.pop %v1819
      %v1823 = vmul.f32 1.0, %v1822
      %v1824 = vadd.f32 %v1724, %v1804
      %v1825 = vadd.f32 %v1725, %v1806
      %v1826 = vxor.u32 %v1824, 2147483648
      %v1827 = vxor.u32 %v1825, 2147483648
      %v1828 = vmul.f32 %v1826, 1.442695
      %v1829 = vpow.pop %v1828
      %v1830 = vmul.f32 %v1827, 1.442695
      %v1831 = vpow.pop %v1830
      %v1832 = vadd.f32 %v1829, 1.0
      %v1833 = vadd.f32 %v1831, 1.0
      %v1834 = vrcp.pop %v1832
      %v1835 = vmul.f32 1.0, %v1834
      %v1836 = vrcp.pop %v1833
      %v1837 = vmul.f32 1.0, %v1836
      %1838 = vmatprep.subr.bf16.mxu0 %v683
      %1839 = vmatpush1.bf16.msra.mxu0 %v682
      %1840 = vmatprep.subr.bf16.mxu0 %v685
      %1841 = vmatpush1.bf16.msra.mxu0 %v684
      %1842 = vmatprep.subr.bf16.mxu0 %v687
      %1843 = vmatpush1.bf16.msra.mxu0 %v686
      %1844 = vmatprep.subr.bf16.mxu0 %v689
      %1845 = vmatpush1.bf16.msra.mxu0 %v688
      %1846 = vmatprep.subr.bf16.mxu0 %v691
      %1847 = vmatpush1.bf16.msra.mxu0 %v690
      %1848 = vmatprep.subr.bf16.mxu0 %v693
      %1849 = vmatpush1.bf16.msra.mxu0 %v692
      %1850 = vmatprep.subr.bf16.mxu0 %v695
      %1851 = vmatpush1.bf16.msra.mxu0 %v694
      %1852 = vmatprep.subr.bf16.mxu0 %v697
      %1853 = vmatpush1.bf16.msra.mxu0 %v696
      %1854 = vmatprep.subr.bf16.mxu0 %v699
      %1855 = vmatpush1.bf16.msra.mxu0 %v698
      %1856 = vmatprep.subr.bf16.mxu0 %v701
      %1857 = vmatpush1.bf16.msra.mxu0 %v700
      %1858 = vmatprep.subr.bf16.mxu0 %v703
      %1859 = vmatpush1.bf16.msra.mxu0 %v702
      %1860 = vmatprep.subr.bf16.mxu0 %v705
      %1861 = vmatpush1.bf16.msra.mxu0 %v704
      %1862 = vmatprep.subr.bf16.mxu0 %v707
      %1863 = vmatpush1.bf16.msra.mxu0 %v706
      %1864 = vmatprep.subr.bf16.mxu0 %v709
      %1865 = vmatpush1.bf16.msra.mxu0 %v708
      %1866 = vmatprep.subr.bf16.mxu0 %v711
      %1867 = vmatpush1.bf16.msra.mxu0 %v710
      %1868 = vmatprep.subr.bf16.mxu0 %v713
      %1869 = vmatpush1.bf16.msra.mxu0 %v712
      %1870 = vmatprep.mubr.bf16.mxu0 %v1717
      %1871 = vmatmul.mubr.bf16.gmra.mrb[0].mxu0 %v1716
      %v1872 = vpop.f32.mrb[0].mxu0
      %v1873 = vadd.f32 %v125, %v1872
      %v1874 = vpop.f32.mrb[0].mxu0
      %v1875 = vadd.f32 %v129, %v1874
      %v1876 = vpop.f32.mrb[0].mxu0
      %v1877 = vpop.f32.mrb[0].mxu0
      %1878 = vdwg.mxu0
      %v1879 = vmul.f32 %v1821, %v1873
      %v1880 = vmul.f32 %v1823, %v1875
      %v1881 = vadd.f32 %v1726, %v1879
      %v1882 = vadd.f32 %v1727, %v1880
      %v1883 = vtanh.pop %v1881
      %v1884 = vtanh.pop %v1882
      %v1885 = vsub.f32 1.0, %v1835
      %v1886 = vsub.f32 1.0, %v1837
      %v1887 = vmul.f32 %v1885, %v1883
      %v1888 = vmul.f32 %v1886, %v1884
      %v1889 = vmul.f32 %v1835, %v1709
      %v1890 = vmul.f32 %v1837, %v1710
      %v1891 = vadd.f32 %v1887, %v1889
      %v1892 = vadd.f32 %v1888, %v1890
      %s1893 = smul.u32 %s1718, 2
      %s1894 = smul.addr %s1893, 8
      %s1895 = scalar_lea.vmem [#allocation3], %s1894
      %1896 = vst [vmem:[%s1895] sm:$0xff] %v1891
      %1897 = vst [vmem:[%s1895 + $0x8] sm:$0xff] %v1892
      %v1898 = vpack.c.bf16 %v1891, %v1891
      %v1899 = vpack.c.bf16 %v1892, %v1892
      %s1900 = sadd.s32 %s146, 7
      %s1901 = smul.u32 %s1900, 6
      %s1902 = smul.addr %s1901, 8
      %s1903 = scalar_lea.vmem %s0, %s1902
      %v1904 = vld [vmem:[%s1903] sm:$0xff]
      %v1905 = vld [vmem:[%s1903 + $0x8] sm:$0xff]
      %v1906 = vld [vmem:[%s1903 + $0x10] sm:$0xff]
      %v1907 = vld [vmem:[%s1903 + $0x18] sm:$0xff]
      %v1908 = vld [vmem:[%s1903 + $0x20] sm:$0xff]
      %v1909 = vld [vmem:[%s1903 + $0x28] sm:$0xff]
      %1910 = vmatprep.subr.bf16.mxu0 %v349
      %1911 = vmatpush1.bf16.msra.mxu0 %v348
      %1912 = vmatprep.subr.bf16.mxu0 %v353
      %1913 = vmatpush1.bf16.msra.mxu0 %v352
      %1914 = vmatprep.subr.bf16.mxu0 %v357
      %1915 = vmatpush1.bf16.msra.mxu0 %v356
      %1916 = vmatprep.subr.bf16.mxu0 %v361
      %1917 = vmatpush1.bf16.msra.mxu0 %v360
      %1918 = vmatprep.subr.bf16.mxu0 %v365
      %1919 = vmatpush1.bf16.msra.mxu0 %v364
      %1920 = vmatprep.subr.bf16.mxu0 %v369
      %1921 = vmatpush1.bf16.msra.mxu0 %v368
      %1922 = vmatprep.subr.bf16.mxu0 %v373
      %1923 = vmatpush1.bf16.msra.mxu0 %v372
      %1924 = vmatprep.subr.bf16.mxu0 %v377
      %1925 = vmatpush1.bf16.msra.mxu0 %v376
      %1926 = vmatprep.subr.bf16.mxu0 %v381
      %1927 = vmatpush1.bf16.msra.mxu0 %v380
      %1928 = vmatprep.subr.bf16.mxu0 %v385
      %1929 = vmatpush1.bf16.msra.mxu0 %v384
      %1930 = vmatprep.subr.bf16.mxu0 %v389
      %1931 = vmatpush1.bf16.msra.mxu0 %v388
      %1932 = vmatprep.subr.bf16.mxu0 %v393
      %1933 = vmatpush1.bf16.msra.mxu0 %v392
      %1934 = vmatprep.subr.bf16.mxu0 %v397
      %1935 = vmatpush1.bf16.msra.mxu0 %v396
      %1936 = vmatprep.subr.bf16.mxu0 %v401
      %1937 = vmatpush1.bf16.msra.mxu0 %v400
      %1938 = vmatprep.subr.bf16.mxu0 %v405
      %1939 = vmatpush1.bf16.msra.mxu0 %v404
      %1940 = vmatprep.subr.bf16.mxu0 %v409
      %1941 = vmatpush1.bf16.msra.mxu0 %v408
      %1942 = vmatprep.mubr.bf16.mxu0 %v1899
      %1943 = vmatmul.mubr.bf16.gmra.mrb[0].mxu0 %v1898
      %v1944 = vpop.f32.mrb[0].mxu0
      %v1945 = vadd.f32 0.0, %v1944
      %v1946 = vpop.f32.mrb[0].mxu0
      %v1947 = vadd.f32 0.0, %v1946
      %v1948 = vpop.f32.mrb[0].mxu0
      %v1949 = vpop.f32.mrb[0].mxu0
      %1950 = vdwg.mxu0
      %1951 = vmatprep.subr.bf16.mxu0 %v351
      %1952 = vmatpush1.bf16.msra.mxu0 %v350
      %1953 = vmatprep.subr.bf16.mxu0 %v355
      %1954 = vmatpush1.bf16.msra.mxu0 %v354
      %1955 = vmatprep.subr.bf16.mxu0 %v359
      %1956 = vmatpush1.bf16.msra.mxu0 %v358
      %1957 = vmatprep.subr.bf16.mxu0 %v363
      %1958 = vmatpush1.bf16.msra.mxu0 %v362
      %1959 = vmatprep.subr.bf16.mxu0 %v367
      %1960 = vmatpush1.bf16.msra.mxu0 %v366
      %1961 = vmatprep.subr.bf16.mxu0 %v371
      %1962 = vmatpush1.bf16.msra.mxu0 %v370
      %1963 = vmatprep.subr.bf16.mxu0 %v375
      %1964 = vmatpush1.bf16.msra.mxu0 %v374
      %1965 = vmatprep.subr.bf16.mxu0 %v379
      %1966 = vmatpush1.bf16.msra.mxu0 %v378
      %1967 = vmatprep.subr.bf16.mxu0 %v383
      %1968 = vmatpush1.bf16.msra.mxu0 %v382
      %1969 = vmatprep.subr.bf16.mxu0 %v387
      %1970 = vmatpush1.bf16.msra.mxu0 %v386
      %1971 = vmatprep.subr.bf16.mxu0 %v391
      %1972 = vmatpush1.bf16.msra.mxu0 %v390
      %1973 = vmatprep.subr.bf16.mxu0 %v395
      %1974 = vmatpush1.bf16.msra.mxu0 %v394
      %1975 = vmatprep.subr.bf16.mxu0 %v399
      %1976 = vmatpush1.bf16.msra.mxu0 %v398
      %1977 = vmatprep.subr.bf16.mxu0 %v403
      %1978 = vmatpush1.bf16.msra.mxu0 %v402
      %1979 = vmatprep.subr.bf16.mxu0 %v407
      %1980 = vmatpush1.bf16.msra.mxu0 %v406
      %1981 = vmatprep.subr.bf16.mxu0 %v411
      %1982 = vmatpush1.bf16.msra.mxu0 %v410
      %1983 = vmatprep.mubr.bf16.mxu0 %v1899
      %1984 = vmatmul.mubr.bf16.gmra.mrb[0].mxu0 %v1898
      %v1985 = vpop.f32.mrb[0].mxu0
      %v1986 = vadd.f32 0.0, %v1985
      %v1987 = vpop.f32.mrb[0].mxu0
      %v1988 = vadd.f32 0.0, %v1987
      %v1989 = vpop.f32.mrb[0].mxu0
      %v1990 = vpop.f32.mrb[0].mxu0
      %1991 = vdwg.mxu0
      %v1992 = vadd.f32 %v1904, %v1945
      %v1993 = vadd.f32 %v1905, %v1947
      %v1994 = vxor.u32 %v1992, 2147483648
      %v1995 = vxor.u32 %v1993, 2147483648
      %v1996 = vmul.f32 %v1994, 1.442695
      %v1997 = vpow.pop %v1996
      %v1998 = vmul.f32 %v1995, 1.442695
      %v1999 = vpow.pop %v1998
      %v2000 = vadd.f32 %v1997, 1.0
      %v2001 = vadd.f32 %v1999, 1.0
      %v2002 = vrcp.pop %v2000
      %v2003 = vmul.f32 1.0, %v2002
      %v2004 = vrcp.pop %v2001
      %v2005 = vmul.f32 1.0, %v2004
      %v2006 = vadd.f32 %v1906, %v1986
      %v2007 = vadd.f32 %v1907, %v1988
      %v2008 = vxor.u32 %v2006, 2147483648
      %v2009 = vxor.u32 %v2007, 2147483648
      %v2010 = vmul.f32 %v2008, 1.442695
      %v2011 = vpow.pop %v2010
      %v2012 = vmul.f32 %v2009, 1.442695
      %v2013 = vpow.pop %v2012
      %v2014 = vadd.f32 %v2011, 1.0
      %v2015 = vadd.f32 %v2013, 1.0
      %v2016 = vrcp.pop %v2014
      %v2017 = vmul.f32 1.0, %v2016
      %v2018 = vrcp.pop %v2015
      %v2019 = vmul.f32 1.0, %v2018
      %2020 = vmatprep.subr.bf16.mxu0 %v683
      %2021 = vmatpush1.bf16.msra.mxu0 %v682
      %2022 = vmatprep.subr.bf16.mxu0 %v685
      %2023 = vmatpush1.bf16.msra.mxu0 %v684
      %2024 = vmatprep.subr.bf16.mxu0 %v687
      %2025 = vmatpush1.bf16.msra.mxu0 %v686
      %2026 = vmatprep.subr.bf16.mxu0 %v689
      %2027 = vmatpush1.bf16.msra.mxu0 %v688
      %2028 = vmatprep.subr.bf16.mxu0 %v691
      %2029 = vmatpush1.bf16.msra.mxu0 %v690
      %2030 = vmatprep.subr.bf16.mxu0 %v693
      %2031 = vmatpush1.bf16.msra.mxu0 %v692
      %2032 = vmatprep.subr.bf16.mxu0 %v695
      %2033 = vmatpush1.bf16.msra.mxu0 %v694
      %2034 = vmatprep.subr.bf16.mxu0 %v697
      %2035 = vmatpush1.bf16.msra.mxu0 %v696
      %2036 = vmatprep.subr.bf16.mxu0 %v699
      %2037 = vmatpush1.bf16.msra.mxu0 %v698
      %2038 = vmatprep.subr.bf16.mxu0 %v701
      %2039 = vmatpush1.bf16.msra.mxu0 %v700
      %2040 = vmatprep.subr.bf16.mxu0 %v703
      %2041 = vmatpush1.bf16.msra.mxu0 %v702
      %2042 = vmatprep.subr.bf16.mxu0 %v705
      %2043 = vmatpush1.bf16.msra.mxu0 %v704
      %2044 = vmatprep.subr.bf16.mxu0 %v707
      %2045 = vmatpush1.bf16.msra.mxu0 %v706
      %2046 = vmatprep.subr.bf16.mxu0 %v709
      %2047 = vmatpush1.bf16.msra.mxu0 %v708
      %2048 = vmatprep.subr.bf16.mxu0 %v711
      %2049 = vmatpush1.bf16.msra.mxu0 %v710
      %2050 = vmatprep.subr.bf16.mxu0 %v713
      %2051 = vmatpush1.bf16.msra.mxu0 %v712
      %2052 = vmatprep.mubr.bf16.mxu0 %v1899
      %2053 = vmatmul.mubr.bf16.gmra.mrb[0].mxu0 %v1898
      %v2054 = vpop.f32.mrb[0].mxu0
      %v2055 = vadd.f32 %v125, %v2054
      %v2056 = vpop.f32.mrb[0].mxu0
      %v2057 = vadd.f32 %v129, %v2056
      %v2058 = vpop.f32.mrb[0].mxu0
      %v2059 = vpop.f32.mrb[0].mxu0
      %2060 = vdwg.mxu0
      %v2061 = vmul.f32 %v2003, %v2055
      %v2062 = vmul.f32 %v2005, %v2057
      %v2063 = vadd.f32 %v1908, %v2061
      %v2064 = vadd.f32 %v1909, %v2062
      %v2065 = vtanh.pop %v2063
      %v2066 = vtanh.pop %v2064
      %v2067 = vsub.f32 1.0, %v2017
      %v2068 = vsub.f32 1.0, %v2019
      %v2069 = vmul.f32 %v2067, %v2065
      %v2070 = vmul.f32 %v2068, %v2066
      %v2071 = vmul.f32 %v2017, %v1891
      %v2072 = vmul.f32 %v2019, %v1892
      %v2073 = vadd.f32 %v2069, %v2071
      %v2074 = vadd.f32 %v2070, %v2072
      %s2075 = smul.u32 %s1900, 2
      %s2076 = smul.addr %s2075, 8
      %s2077 = scalar_lea.vmem [#allocation3], %s2076
      %2078 = vst [vmem:[%s2077] sm:$0xff] %v2073
      %2079 = vst [vmem:[%s2077 + $0x8] sm:$0xff] %v2074
      %v2080 = vpack.c.bf16 %v2073, %v2073
      %v2081 = vpack.c.bf16 %v2074, %v2074
    $region22: #{encoder_forward.1} parent=1 // loop_footer
      %s141 = sadd.s32 1, %s137
    $region23: #{encoder_forward.1} parent=1 // loop_footer_branch
      %136 = sbr.rel target = $region19
    $region24: #{encoder_forward.1} parent=1 // loop_exit
      _
    %2082 = vst [vmem:[#allocation2] sm:$0xff] %v142
    %2083 = vst [vmem:[#allocation2 + $0x8] sm:$0xff] %v143
    // Predicated region
    $region25: #{encoder_forward.1} parent=1 // pred_check
      %p2084 = pneg %p18
    $region26: #{encoder_forward.1} parent=1 // pred_check_branch
      %2086 = sbr.rel (%p2084) target = $region28
    $region27: #{encoder_forward.1} parent=1 // pred_region
      %2087 = vst [vmem:[#allocation5] sm:$0xff] %v142
      %2088 = vst [vmem:[#allocation5 + $0x8] sm:$0xff] %v143
    $region28: #{encoder_forward.1} parent=1 // pred_fallthru
      _
    // Predicated region
    $region29: #{encoder_forward.1} parent=1 // pred_check
      _
    $region30: #{encoder_forward.1} parent=1 // pred_check_branch
      %2090 = sbr.rel (0) target = $region32
    $region31: #{encoder_forward.1} parent=1 // pred_region
      %s2092 = ssub.s32 4096, 4096
      %2093 = vsyncadd [#allocation4], %s2092
      %s2094 = sshll.u32 [#allocation3], 4
      %s2095 = int_to_ptr.vmem [resolvable:$true] %s2094
      %2100 = dma.vmem_to_hbm [thread:$0]  %s2095, 4096, %s3, [#allocation4], 256, 256, 16
    $region32: #{encoder_forward.1} parent=1 // pred_fallthru
      _
    // Predicated region
    $region33: #{encoder_forward.1} parent=1 // pred_check
      _
    $region34: #{encoder_forward.1} parent=1 // pred_check_branch
      %2102 = sbr.rel (0) target = $region36
    $region35: #{encoder_forward.1} parent=1 // pred_region
      %s2104 = ssub.s32 256, 256
      %2105 = vsyncadd [#allocation6], %s2104
      %s2107 = sshll.u32 [#allocation5], 4
      %s2108 = int_to_ptr.vmem [resolvable:$true] %s2107
      %2110 = dma.vmem_to_hbm [thread:$0]  %s2108, 256, %s4, [#allocation6]
    $region36: #{encoder_forward.1} parent=1 // pred_fallthru
      _
    // Predicated region
    $region37: #{encoder_forward.1} parent=1 // pred_check
      _
    $region38: #{encoder_forward.1} parent=1 // pred_check_branch
      %2112 = sbr.rel (0) target = $region40
    $region39: #{encoder_forward.1} parent=1 // pred_region
      %2113 = dma.done [#allocation4], 4096
    $region40: #{encoder_forward.1} parent=1 // pred_fallthru
      _
    // Predicated region
    $region41: #{encoder_forward.1} parent=1 // pred_check
      _
    $region42: #{encoder_forward.1} parent=1 // pred_check_branch
      %2115 = sbr.rel (0) target = $region44
    $region43: #{encoder_forward.1} parent=1 // pred_region
      %2116 = dma.done [#allocation6], 256
    $region44: #{encoder_forward.1} parent=1 // pred_fallthru
      _
    %2117 = vsyncpa [#allocation4], 1
    %2118 = vsyncpa [#allocation6], 1

</llo_original>
